<compile_context>
chip_gen: v7x
topology: tpu7x:2x2x1
jax: 0.10.0
libtpu: 0.0.40
codegen_flags: <defaults>
</compile_context>

<pallas_src>
import functools
import math

import jax
import jax.numpy as jnp
from jax.experimental import pallas as pl
from jax.experimental.pallas import tpu as pltpu

LN_EPS = 1e-5  # nn.LayerNorm default


def _layer_norm(h, gamma, beta):
    """Single-pass LayerNorm: derive mean/var from sum(x), sum(x*x)."""
    d = h.shape[-1]
    inv_d = 1.0 / float(d)
    s1 = jnp.sum(h, axis=-1, keepdims=True)
    s2 = jnp.sum(h * h, axis=-1, keepdims=True)
    mu = s1 * inv_d
    var = jnp.maximum(s2 * inv_d - mu * mu, 0.0)
    return (h - mu) * jax.lax.rsqrt(var + LN_EPS) * gamma + beta


def encoder_kernel(
    x_ref,
    wqkv_ref, bqkv_ref,
    wo_ref, bo_ref,
    g1_ref, be1_ref,
    w1_ref, b1_ref, w2_ref, b2_ref,
    g2_ref, be2_ref,
    o_ref,
    *, compute_dtype, weights_resident,
):
    layer = pl.program_id(1)
    # When weights are resident (full-L blocks, constant index_map) the kernel
    # indexes the layer dimension itself; otherwise each block is (1, ...).
    li = layer if weights_resident else 0

    # Seed the resident activation (o_ref doubles as the carried residual
    # stream across the layer axis) from the input on the first layer.
    @pl.when(layer == 0)
    def _():
        o_ref[...] = x_ref[...]

    bblk, s, d = o_ref.shape
    m = bblk * s

    x = o_ref[...].astype(jnp.float32).reshape(m, d)   # residual stream (f32)
    xc = x.astype(compute_dtype)

    # ---- fused QKV projection (1/sqrt(D) pre-folded into the Q slice) ----
    qkv = jnp.dot(xc, wqkv_ref[li], preferred_element_type=jnp.float32) + bqkv_ref[li]
    q = qkv[:, :d].astype(compute_dtype).reshape(bblk, s, d)
    k = qkv[:, d:2 * d].astype(compute_dtype).reshape(bblk, s, d)
    v = qkv[:, 2 * d:].astype(compute_dtype).reshape(bblk, s, d)

    # ---- self-attention (the single head shared by all heads) ----
    scores = jnp.einsum("bqd,bkd->bqk", q, k, preferred_element_type=jnp.float32)
    scores = scores - jnp.max(scores, axis=-1, keepdims=True)
    p = jnp.exp(scores)
    attn = p * pl.reciprocal(jnp.sum(p, axis=-1, keepdims=True), approx=True)
    z = jnp.einsum("bqk,bkd->bqd", attn.astype(compute_dtype), v,
                   preferred_element_type=jnp.float32)

    # ---- output projection (WO pre-reduced over the identical heads) ----
    zc = z.reshape(m, d).astype(compute_dtype)
    attn_out = jnp.dot(zc, wo_ref[li], preferred_element_type=jnp.float32) + bo_ref[li]

    # ---- residual + LayerNorm 1 (f32) ----
    x1 = _layer_norm(x + attn_out, g1_ref[li], be1_ref[li])

    # ---- feed forward: Linear -> ReLU -> Linear ----
    h = jnp.dot(x1.astype(compute_dtype), w1_ref[li],
                preferred_element_type=jnp.float32) + b1_ref[li]
    h = jnp.maximum(h, 0.0)
    ff = jnp.dot(h.astype(compute_dtype), w2_ref[li],
                 preferred_element_type=jnp.float32) + b2_ref[li]

    # ---- residual + LayerNorm 2 (f32) ----
    out = _layer_norm(x1 + ff, g2_ref[li], be2_ref[li])
    o_ref[...] = out.reshape(bblk, s, d).astype(o_ref.dtype)


# ----------------------- VMEM budgeting / block selection -----------------------

def _tpu_vmem_capacity_bytes():
    try:
        cap = int(pltpu.get_tpu_info().vmem_capacity_bytes)
        if cap > 0:
            return cap
    except Exception:
        pass
    try:
        kind = jax.devices()[0].device_kind.lower()
        if "v7" in kind:
            return 64 * 2 ** 20
    except Exception:
        pass
    return 128 * 2 ** 20


def _intermediates_bytes(bb, S, D, F, csize):
    """Enumerated upper bound on simultaneously-live in-kernel intermediates."""
    M = bb * S
    f32 = 4
    b = 0
    b += M * D * f32            # x residual (f32)
    b += M * D * csize          # xc
    b += M * 3 * D * f32        # qkv
    b += 3 * M * D * csize      # q, k, v
    b += 3 * bb * S * S * f32   # scores / p / attn (f32)
    b += bb * S * S * csize     # attn cast for PV matmul
    b += M * D * f32            # z
    b += M * D * csize          # zc
    b += 2 * M * D * f32        # attn_out, x1
    b += M * D * csize          # x1 cast
    b += M * F * f32            # h (f32)
    b += M * F * csize          # h cast
    b += 2 * M * D * f32        # ff, out
    return b


def _block_vmem_bytes(bb, S, D, F, x_itemsize, csize, param_arrays, weights_resident):
    act = 4 * bb * S * D * x_itemsize   # x + out blocks, double-buffered
    if weights_resident:
        par = sum(2 * math.prod(a.shape) * a.dtype.itemsize for a in param_arrays)
    else:
        par = sum(2 * math.prod(a.shape[1:]) * a.dtype.itemsize for a in param_arrays)
    return act + par + _intermediates_bytes(bb, S, D, F, csize)


def _choose_block_b(batch, S, D, F, x_itemsize, csize, param_arrays, budget, two_tc):
    """Largest batch block whose VMEM estimate fits the per-generation budget.
    On 2-TC parts keep >=2 blocks (prefer an even count) on the parallel axis;
    on single-TC parts (v5e/v6e) maximize the block to cut weight re-streaming."""
    divisors = [d for d in range(1, batch + 1) if batch % d == 0]
    fitting = [d for d in divisors
               if _block_vmem_bytes(d, S, D, F, x_itemsize, csize,
                                    param_arrays, False) <= budget]
    if not fitting:
        fitting = [1]
    if two_tc:
        cand = [d for d in fitting if (batch // d) >= 2 and (batch // d) % 2 == 0]
        if not cand:
            cand = [d for d in fitting if (batch // d) >= 2]
        if not cand:
            cand = fitting
        return max(cand)
    return max(fitting)


# ----------------------------- forward wrapper -----------------------------

def encoder_forward(x, stacked, *, compute_dtype=jnp.bfloat16):
    """x: (B, S, D).  stacked: dict of per-layer-stacked, kernel-ready params."""
    B, S, D = x.shape
    L = stacked["wqkv"].shape[0]
    F = stacked["w1"].shape[-1]

    names = ["wqkv", "bqkv", "wo", "bo", "g1", "be1",
             "w1", "b1", "w2", "b2", "g2", "be2"]
    param_arrays = [stacked[n] for n in names]

    cap = _tpu_vmem_capacity_bytes()
    budget = int(0.8 * cap)
    two_tc = cap <= 80 * 2 ** 20          # v7x-like: small VMEM, 2 TCs/chip
    csize = jnp.dtype(compute_dtype).itemsize
    x_itemsize = x.dtype.itemsize

    bb = _choose_block_b(B, S, D, F, x_itemsize, csize, param_arrays, budget, two_tc)

    # Keep all layer weights resident in VMEM (DMA'd once) when they fit and
    # there is more than one batch block (otherwise there is nothing to save).
    est_resident = _block_vmem_bytes(bb, S, D, F, x_itemsize, csize, param_arrays, True)
    est_streamed = _block_vmem_bytes(bb, S, D, F, x_itemsize, csize, param_arrays, False)
    weights_resident = (B // bb > 1) and (est_resident <= budget)
    est = est_resident if weights_resident else est_streamed
    vmem_limit = int(min(budget, max(16 * 2 ** 20, int(1.25 * est) + (2 << 20))))

    def layer_spec(arr):
        if weights_resident:
            blk = arr.shape
            n = len(blk)
            return pl.BlockSpec(blk, lambda b, l, _n=n: (0,) * _n)
        blk = (1,) + arr.shape[1:]
        n = len(blk)
        return pl.BlockSpec(blk, lambda b, l, _n=n: (l,) + (0,) * (_n - 1))

    in_specs = [pl.BlockSpec((bb, S, D), lambda b, l: (b, 0, 0))] + \
               [layer_spec(a) for a in param_arrays]
    out_specs = pl.BlockSpec((bb, S, D), lambda b, l: (b, 0, 0))

    kernel = functools.partial(encoder_kernel,
                               compute_dtype=compute_dtype,
                               weights_resident=weights_resident)
    grid_spec = pltpu.PrefetchScalarGridSpec(
        num_scalar_prefetch=0,
        grid=(B // bb, L),
        in_specs=in_specs,
        out_specs=out_specs,
    )
    return pl.pallas_call(
        kernel,
        out_shape=jax.ShapeDtypeStruct((B, S, D), x.dtype),
        grid_spec=grid_spec,
        compiler_params=pltpu.CompilerParams(
            dimension_semantics=("parallel", "arbitrary"),
            vmem_limit_bytes=vmem_limit,
        ),
    )(x, *param_arrays)


# ----------------------- parameter init + pure-JAX reference -----------------------

def init_layer_params(key, dim_input, num_heads, dim_ff):
    """Deterministic init.  Weights stored in PyTorch convention (out, in)."""
    ks = jax.random.split(key, 12)
    D, H, F = dim_input, num_heads, dim_ff
    return {
        "WQ": jax.random.normal(ks[0], (D, D), jnp.float32) * 0.05,
        "bq": jax.random.normal(ks[1], (D,), jnp.float32) * 0.05,
        "WK": jax.random.normal(ks[2], (D, D), jnp.float32) * 0.05,
        "bk": jax.random.normal(ks[3], (D,), jnp.float32) * 0.05,
        "WV": jax.random.normal(ks[4], (D, D), jnp.float32) * 0.05,
        "bv": jax.random.normal(ks[5], (D,), jnp.float32) * 0.05,
        "WO": jax.random.normal(ks[6], (D, D * H), jnp.float32) * 0.05,
        "bo": jax.random.normal(ks[7], (D,), jnp.float32) * 0.05,
        "g1": jnp.ones((D,), jnp.float32),
        "be1": jnp.zeros((D,), jnp.float32),
        "W1": jax.random.normal(ks[8], (F, D), jnp.float32) * 0.05,
        "b1": jax.random.normal(ks[9], (F,), jnp.float32) * 0.05,
        "W2": jax.random.normal(ks[10], (D, F), jnp.float32) * 0.05,
        "b2": jax.random.normal(ks[11], (D,), jnp.float32) * 0.05,
        "g2": jnp.ones((D,), jnp.float32),
        "be2": jnp.zeros((D,), jnp.float32),
    }


def stack_kernel_params(layer_params, num_heads, compute_dtype):
    """Per layer: fuse QKV (with 1/sqrt(D) folded into Q), pre-reduce WO over
    the identical heads, pre-transpose weights to (in, out), cast matmul
    weights to compute_dtype; then stack all layers along a leading axis."""
    D = layer_params[0]["WQ"].shape[0]
    scale = 1.0 / math.sqrt(float(D))
    r1 = lambda v: v.reshape(1, -1).astype(jnp.float32)

    def one(p):
        wqkv = jnp.concatenate([p["WQ"].T * scale, p["WK"].T, p["WV"].T], axis=1)
        bqkv = jnp.concatenate([p["bq"] * scale, p["bk"], p["bv"]]).reshape(1, -1)
        wo_eff = p["WO"].T.reshape(num_heads, D, D).sum(axis=0)  # heads identical
        return {
            "wqkv": wqkv.astype(compute_dtype), "bqkv": bqkv.astype(jnp.float32),
            "wo": wo_eff.astype(compute_dtype), "bo": r1(p["bo"]),
            "g1": r1(p["g1"]), "be1": r1(p["be1"]),
            "w1": p["W1"].T.astype(compute_dtype), "b1": r1(p["b1"]),
            "w2": p["W2"].T.astype(compute_dtype), "b2": r1(p["b2"]),
            "g2": r1(p["g2"]), "be2": r1(p["be2"]),
        }

    per = [one(p) for p in layer_params]
    return {k: jnp.stack([d[k] for d in per], axis=0) for k in per[0]}


def ref_forward(x, layer_params, num_heads):
    """Pure-JAX reference mirroring the PyTorch Encoder exactly."""
    D = x.shape[-1]
    lin = lambda t, W, b: jnp.einsum("...d,ed->...e", t, W) + b

    def ln(h, g, be):
        mu = jnp.mean(h, axis=-1, keepdims=True)
        var = jnp.mean((h - mu) ** 2, axis=-1, keepdims=True)
        return (h - mu) / jnp.sqrt(var + LN_EPS) * g + be

    for p in layer_params:
        q = lin(x, p["WQ"], p["bq"])
        k = lin(x, p["WK"], p["bk"])
        v = lin(x, p["WV"], p["bv"])
        scores = jnp.einsum("bqd,bkd->bqk", q, k) / jnp.sqrt(jnp.float32(D))
        attn = jax.nn.softmax(scores, axis=-1)
        z = jnp.einsum("bqk,bkd->bqd", attn, v)
        z_cat = jnp.concatenate([z] * num_heads, axis=-1)
        a = jnp.einsum("...e,de->...d", z_cat, p["WO"]) + p["bo"]
        x1 = ln(x + a, p["g1"], p["be1"])
        h = jax.nn.relu(lin(x1, p["W1"], p["b1"]))
        ff = lin(h, p["W2"], p["b2"])
        x = ln(x1 + ff, p["g2"], p["be2"])
    return x


if __name__ == "__main__":
    B, S, D = 2, 8, 32       # batch, sequence length, model dim
    num_heads = 4
    dim_ff = 64
    num_layers = 2

    key = jax.random.PRNGKey(0)
    kx, kp = jax.random.split(key)
    x = jax.random.normal(kx, (B, S, D), jnp.float32)

    layer_keys = jax.random.split(kp, num_layers)
    layer_params = [init_layer_params(k, D, num_heads, dim_ff) for k in layer_keys]

    ref = jax.block_until_ready(ref_forward(x, layer_params, num_heads))

    # f32 compute path: tight structural check (WO fold / QKV fuse / approx recip).
    stacked_f32 = stack_kernel_params(layer_params, num_heads, jnp.float32)
    out_f32 = jax.block_until_ready(
        encoder_forward(x, stacked_f32, compute_dtype=jnp.float32))
    assert out_f32.shape == (B, S, D)
    err_f32 = float(jnp.max(jnp.abs(out_f32 - ref)))
    assert err_f32 < 5e-3, err_f32

    # bf16 compute path (default, MXU-native).
    stacked_bf16 = stack_kernel_params(layer_params, num_heads, jnp.bfloat16)
    out_bf16 = jax.block_until_ready(
        encoder_forward(x, stacked_bf16, compute_dtype=jnp.bfloat16))
    assert out_bf16.shape == (B, S, D)
    err_bf16 = float(jnp.max(jnp.abs(out_bf16 - ref)))
    assert err_bf16 < 1e-1, err_bf16

    print("KERNEL_OK")
</pallas_src>

<mosaic_0001>
module attributes {stable_mosaic.version = 11 : i64} {
  func.func @encoder_kernel(%arg0: i32, %arg1: i32, %arg2: memref<2x8x32xf32, #tpu.memory_space<vmem>>, %arg3: memref<1x32x96xf32, #tpu.memory_space<vmem>>, %arg4: memref<1x1x96xf32, #tpu.memory_space<vmem>>, %arg5: memref<1x32x32xf32, #tpu.memory_space<vmem>>, %arg6: memref<1x1x32xf32, #tpu.memory_space<vmem>>, %arg7: memref<1x1x32xf32, #tpu.memory_space<vmem>>, %arg8: memref<1x1x32xf32, #tpu.memory_space<vmem>>, %arg9: memref<1x32x64xf32, #tpu.memory_space<vmem>>, %arg10: memref<1x1x64xf32, #tpu.memory_space<vmem>>, %arg11: memref<1x64x32xf32, #tpu.memory_space<vmem>>, %arg12: memref<1x1x32xf32, #tpu.memory_space<vmem>>, %arg13: memref<1x1x32xf32, #tpu.memory_space<vmem>>, %arg14: memref<1x1x32xf32, #tpu.memory_space<vmem>>, %arg15: memref<2x8x32xf32, #tpu.memory_space<vmem>>) attributes {dimension_semantics = [#tpu.dimension_semantics<parallel>, #tpu.dimension_semantics<arbitrary>], iteration_bounds = array<i64: 1, 2>, scalar_prefetch = 0 : i64, scratch_operands = 0 : i64, tpu.core_type = #tpu.core_type<tc>, window_params = [{transform_indices = @transform_0, window_bounds = array<i64: 2, 8, 32>}, {transform_indices = @transform_1, window_bounds = array<i64: 1, 32, 96>}, {transform_indices = @transform_2, window_bounds = array<i64: 1, 1, 96>}, {transform_indices = @transform_3, window_bounds = array<i64: 1, 32, 32>}, {transform_indices = @transform_4, window_bounds = array<i64: 1, 1, 32>}, {transform_indices = @transform_5, window_bounds = array<i64: 1, 1, 32>}, {transform_indices = @transform_6, window_bounds = array<i64: 1, 1, 32>}, {transform_indices = @transform_7, window_bounds = array<i64: 1, 32, 64>}, {transform_indices = @transform_8, window_bounds = array<i64: 1, 1, 64>}, {transform_indices = @transform_9, window_bounds = array<i64: 1, 64, 32>}, {transform_indices = @transform_10, window_bounds = array<i64: 1, 1, 32>}, {transform_indices = @transform_11, window_bounds = array<i64: 1, 1, 32>}, {transform_indices = @transform_12, window_bounds = array<i64: 1, 1, 32>}, {transform_indices = @transform_13, window_bounds = array<i64: 2, 8, 32>}]} {
    %c0_i32 = arith.constant 0 : i32
    %0 = arith.cmpi eq, %arg1, %c0_i32 : i32
    %1 = arith.extui %0 : i1 to i32
    %c0_i32_0 = arith.constant 0 : i32
    %2 = arith.cmpi ne, %1, %c0_i32_0 : i32
    scf.if %2 {
      %c0_62 = arith.constant 0 : index
      %c0_63 = arith.constant 0 : index
      %c0_64 = arith.constant 0 : index
      %114 = vector.load %arg2[%c0_62, %c0_63, %c0_64] : memref<2x8x32xf32, #tpu.memory_space<vmem>>, vector<2x8x32xf32>
      %c0_65 = arith.constant 0 : index
      %c0_66 = arith.constant 0 : index
      %c0_67 = arith.constant 0 : index
      %115 = vector.load %arg15[%c0_65, %c0_66, %c0_67] : memref<2x8x32xf32, #tpu.memory_space<vmem>>, vector<2x8x32xf32>
      tpu.vector_store %arg15[%c0_65, %c0_66, %c0_67], %114 {strides = array<i32>} : memref<2x8x32xf32, #tpu.memory_space<vmem>>, vector<2x8x32xf32>,
    } else {
    }
    %c0 = arith.constant 0 : index
    %c0_1 = arith.constant 0 : index
    %c0_2 = arith.constant 0 : index
    %3 = vector.load %arg15[%c0, %c0_1, %c0_2] : memref<2x8x32xf32, #tpu.memory_space<vmem>>, vector<2x8x32xf32>
    %4 = vector.shape_cast %3 : vector<2x8x32xf32> to vector<16x32xf32>
    %c0_3 = arith.constant 0 : index
    %c0_4 = arith.constant 0 : index
    %c0_5 = arith.constant 0 : index
    %5 = vector.load %arg3[%c0_3, %c0_4, %c0_5] : memref<1x32x96xf32, #tpu.memory_space<vmem>>, vector<1x32x96xf32>
    %6 = vector.shape_cast %5 : vector<1x32x96xf32> to vector<32x96xf32>
    %cst = arith.constant dense<0.000000e+00> : vector<16x96xf32>
    %7 = tpu.matmul %4, %6, %cst {dimension_numbers = #tpu.dot_dimension_numbers<[1], [0], [0], [1], [0, 0, 1, 1], [], []>} : vector<16x32xf32>, vector<32x96xf32>, vector<16x96xf32> -> vector<16x96xf32>
    %c0_6 = arith.constant 0 : index
    %c0_7 = arith.constant 0 : index
    %c0_8 = arith.constant 0 : index
    %8 = vector.load %arg4[%c0_6, %c0_7, %c0_8] : memref<1x1x96xf32, #tpu.memory_space<vmem>>, vector<1x1x96xf32>
    %9 = vector.shape_cast %8 : vector<1x1x96xf32> to vector<1x96xf32>
    %10 = vector.broadcast %9 : vector<1x96xf32> to vector<16x96xf32>
    %11 = arith.addf %7, %10 : vector<16x96xf32>
    %12 = vector.extract_strided_slice %11 {offsets = [0, 0], sizes = [16, 32], strides = [1, 1]} : vector<16x96xf32> to vector<16x32xf32>
    %13 = vector.shape_cast %12 : vector<16x32xf32> to vector<2x8x32xf32>
    %14 = vector.extract_strided_slice %11 {offsets = [0, 32], sizes = [16, 32], strides = [1, 1]} : vector<16x96xf32> to vector<16x32xf32>
    %15 = vector.shape_cast %14 : vector<16x32xf32> to vector<2x8x32xf32>
    %16 = vector.extract_strided_slice %11 {offsets = [0, 64], sizes = [16, 32], strides = [1, 1]} : vector<16x96xf32> to vector<16x32xf32>
    %17 = vector.shape_cast %16 : vector<16x32xf32> to vector<2x8x32xf32>
    "tpu.trace_start"() <{level = 10 : i32, message = "bqd,bkd->bqk"}> : () -> ()
    %cst_9 = arith.constant dense<0.000000e+00> : vector<2x8x8xf32>
    %18 = tpu.matmul %13, %15, %cst_9 {dimension_numbers = #tpu.dot_dimension_numbers<[2], [2], [1], [1], [0, 0, 0, 1, 1, 1], [0], [0]>} : vector<2x8x32xf32>, vector<2x8x32xf32>, vector<2x8x8xf32> -> vector<2x8x8xf32>
    "tpu.trace_stop"() : () -> ()
    %cst_10 = arith.constant dense<0xFF800000> : vector<2x8xf32>
    %19 = vector.multi_reduction <maximumf>, %18, %cst_10 [2] : vector<2x8x8xf32> to vector<2x8xf32>
    %20 = vector.shape_cast %19 : vector<2x8xf32> to vector<2x8x1xf32>
    %21 = vector.broadcast %20 : vector<2x8x1xf32> to vector<2x8x8xf32>
    %22 = arith.subf %18, %21 : vector<2x8x8xf32>
    %23 = math.exp %22 : vector<2x8x8xf32>
    %cst_11 = arith.constant dense<0.000000e+00> : vector<2x8xf32>
    %24 = vector.multi_reduction <add>, %23, %cst_11 [2] : vector<2x8x8xf32> to vector<2x8xf32>
    %25 = vector.shape_cast %24 : vector<2x8xf32> to vector<2x8x1xf32>
    %26 = tpu.reciprocal %25 {approx = true} : vector<2x8x1xf32> -> vector<2x8x1xf32>
    %27 = vector.broadcast %26 : vector<2x8x1xf32> to vector<2x8x8xf32>
    %28 = arith.mulf %23, %27 : vector<2x8x8xf32>
    "tpu.trace_start"() <{level = 10 : i32, message = "bqk,bkd->bqd"}> : () -> ()
    %cst_12 = arith.constant dense<0.000000e+00> : vector<2x8x32xf32>
    %29 = tpu.matmul %28, %17, %cst_12 {dimension_numbers = #tpu.dot_dimension_numbers<[2], [1], [1], [2], [0, 0, 0, 1, 1, 2], [0], [0]>} : vector<2x8x8xf32>, vector<2x8x32xf32>, vector<2x8x32xf32> -> vector<2x8x32xf32>
    "tpu.trace_stop"() : () -> ()
    %30 = vector.shape_cast %29 : vector<2x8x32xf32> to vector<16x32xf32>
    %c0_13 = arith.constant 0 : index
    %c0_14 = arith.constant 0 : index
    %c0_15 = arith.constant 0 : index
    %31 = vector.load %arg5[%c0_13, %c0_14, %c0_15] : memref<1x32x32xf32, #tpu.memory_space<vmem>>, vector<1x32x32xf32>
    %32 = vector.shape_cast %31 : vector<1x32x32xf32> to vector<32x32xf32>
    %cst_16 = arith.constant dense<0.000000e+00> : vector<16x32xf32>
    %33 = tpu.matmul %30, %32, %cst_16 {dimension_numbers = #tpu.dot_dimension_numbers<[1], [0], [0], [1], [0, 0, 1, 1], [], []>} : vector<16x32xf32>, vector<32x32xf32>, vector<16x32xf32> -> vector<16x32xf32>
    %c0_17 = arith.constant 0 : index
    %c0_18 = arith.constant 0 : index
    %c0_19 = arith.constant 0 : index
    %34 = vector.load %arg6[%c0_17, %c0_18, %c0_19] : memref<1x1x32xf32, #tpu.memory_space<vmem>>, vector<1x1x32xf32>
    %35 = vector.shape_cast %34 : vector<1x1x32xf32> to vector<1x32xf32>
    %36 = vector.broadcast %35 : vector<1x32xf32> to vector<16x32xf32>
    %37 = arith.addf %33, %36 : vector<16x32xf32>
    %38 = arith.addf %4, %37 : vector<16x32xf32>
    %c0_20 = arith.constant 0 : index
    %c0_21 = arith.constant 0 : index
    %c0_22 = arith.constant 0 : index
    %39 = vector.load %arg7[%c0_20, %c0_21, %c0_22] : memref<1x1x32xf32, #tpu.memory_space<vmem>>, vector<1x1x32xf32>
    %40 = vector.shape_cast %39 : vector<1x1x32xf32> to vector<1x32xf32>
    %c0_23 = arith.constant 0 : index
    %c0_24 = arith.constant 0 : index
    %c0_25 = arith.constant 0 : index
    %41 = vector.load %arg8[%c0_23, %c0_24, %c0_25] : memref<1x1x32xf32, #tpu.memory_space<vmem>>, vector<1x1x32xf32>
    %42 = vector.shape_cast %41 : vector<1x1x32xf32> to vector<1x32xf32>
    %cst_26 = arith.constant dense<0.000000e+00> : vector<16xf32>
    %43 = vector.multi_reduction <add>, %38, %cst_26 [1] : vector<16x32xf32> to vector<16xf32>
    %44 = vector.shape_cast %43 : vector<16xf32> to vector<16x1xf32>
    %45 = arith.mulf %38, %38 : vector<16x32xf32>
    %cst_27 = arith.constant dense<0.000000e+00> : vector<16xf32>
    %46 = vector.multi_reduction <add>, %45, %cst_27 [1] : vector<16x32xf32> to vector<16xf32>
    %47 = vector.shape_cast %46 : vector<16xf32> to vector<16x1xf32>
    %cst_28 = arith.constant 3.125000e-02 : f32
    %48 = vector.broadcast %cst_28 : f32 to vector<16x1xf32>
    %49 = arith.mulf %44, %48 : vector<16x1xf32>
    %cst_29 = arith.constant 3.125000e-02 : f32
    %50 = vector.broadcast %cst_29 : f32 to vector<16x1xf32>
    %51 = arith.mulf %47, %50 : vector<16x1xf32>
    %52 = arith.mulf %49, %49 : vector<16x1xf32>
    %53 = arith.subf %51, %52 : vector<16x1xf32>
    %cst_30 = arith.constant 0.000000e+00 : f32
    %54 = vector.broadcast %cst_30 : f32 to vector<16x1xf32>
    %55 = arith.maximumf %53, %54 : vector<16x1xf32>
    %56 = vector.broadcast %49 : vector<16x1xf32> to vector<16x32xf32>
    %57 = arith.subf %38, %56 : vector<16x32xf32>
    %cst_31 = arith.constant 9.99999974E-6 : f32
    %58 = vector.broadcast %cst_31 : f32 to vector<16x1xf32>
    %59 = arith.addf %55, %58 : vector<16x1xf32>
    %60 = math.rsqrt %59 : vector<16x1xf32>
    %61 = vector.broadcast %60 : vector<16x1xf32> to vector<16x32xf32>
    %62 = arith.mulf %57, %61 : vector<16x32xf32>
    %63 = vector.broadcast %40 : vector<1x32xf32> to vector<16x32xf32>
    %64 = arith.mulf %62, %63 : vector<16x32xf32>
    %65 = vector.broadcast %42 : vector<1x32xf32> to vector<16x32xf32>
    %66 = arith.addf %64, %65 : vector<16x32xf32>
    %c0_32 = arith.constant 0 : index
    %c0_33 = arith.constant 0 : index
    %c0_34 = arith.constant 0 : index
    %67 = vector.load %arg9[%c0_32, %c0_33, %c0_34] : memref<1x32x64xf32, #tpu.memory_space<vmem>>, vector<1x32x64xf32>
    %68 = vector.shape_cast %67 : vector<1x32x64xf32> to vector<32x64xf32>
    %cst_35 = arith.constant dense<0.000000e+00> : vector<16x64xf32>
    %69 = tpu.matmul %66, %68, %cst_35 {dimension_numbers = #tpu.dot_dimension_numbers<[1], [0], [0], [1], [0, 0, 1, 1], [], []>} : vector<16x32xf32>, vector<32x64xf32>, vector<16x64xf32> -> vector<16x64xf32>
    %c0_36 = arith.constant 0 : index
    %c0_37 = arith.constant 0 : index
    %c0_38 = arith.constant 0 : index
    %70 = vector.load %arg10[%c0_36, %c0_37, %c0_38] : memref<1x1x64xf32, #tpu.memory_space<vmem>>, vector<1x1x64xf32>
    %71 = vector.shape_cast %70 : vector<1x1x64xf32> to vector<1x64xf32>
    %72 = vector.broadcast %71 : vector<1x64xf32> to vector<16x64xf32>
    %73 = arith.addf %69, %72 : vector<16x64xf32>
    %cst_39 = arith.constant 0.000000e+00 : f32
    %74 = vector.broadcast %cst_39 : f32 to vector<16x64xf32>
    %75 = arith.maximumf %73, %74 : vector<16x64xf32>
    %c0_40 = arith.constant 0 : index
    %c0_41 = arith.constant 0 : index
    %c0_42 = arith.constant 0 : index
    %76 = vector.load %arg11[%c0_40, %c0_41, %c0_42] : memref<1x64x32xf32, #tpu.memory_space<vmem>>, vector<1x64x32xf32>
    %77 = vector.shape_cast %76 : vector<1x64x32xf32> to vector<64x32xf32>
    %cst_43 = arith.constant dense<0.000000e+00> : vector<16x32xf32>
    %78 = tpu.matmul %75, %77, %cst_43 {dimension_numbers = #tpu.dot_dimension_numbers<[1], [0], [0], [1], [0, 0, 1, 1], [], []>} : vector<16x64xf32>, vector<64x32xf32>, vector<16x32xf32> -> vector<16x32xf32>
    %c0_44 = arith.constant 0 : index
    %c0_45 = arith.constant 0 : index
    %c0_46 = arith.constant 0 : index
    %79 = vector.load %arg12[%c0_44, %c0_45, %c0_46] : memref<1x1x32xf32, #tpu.memory_space<vmem>>, vector<1x1x32xf32>
    %80 = vector.shape_cast %79 : vector<1x1x32xf32> to vector<1x32xf32>
    %81 = vector.broadcast %80 : vector<1x32xf32> to vector<16x32xf32>
    %82 = arith.addf %78, %81 : vector<16x32xf32>
    %83 = arith.addf %66, %82 : vector<16x32xf32>
    %c0_47 = arith.constant 0 : index
    %c0_48 = arith.constant 0 : index
    %c0_49 = arith.constant 0 : index
    %84 = vector.load %arg13[%c0_47, %c0_48, %c0_49] : memref<1x1x32xf32, #tpu.memory_space<vmem>>, vector<1x1x32xf32>
    %85 = vector.shape_cast %84 : vector<1x1x32xf32> to vector<1x32xf32>
    %c0_50 = arith.constant 0 : index
    %c0_51 = arith.constant 0 : index
    %c0_52 = arith.constant 0 : index
    %86 = vector.load %arg14[%c0_50, %c0_51, %c0_52] : memref<1x1x32xf32, #tpu.memory_space<vmem>>, vector<1x1x32xf32>
    %87 = vector.shape_cast %86 : vector<1x1x32xf32> to vector<1x32xf32>
    %cst_53 = arith.constant dense<0.000000e+00> : vector<16xf32>
    %88 = vector.multi_reduction <add>, %83, %cst_53 [1] : vector<16x32xf32> to vector<16xf32>
    %89 = vector.shape_cast %88 : vector<16xf32> to vector<16x1xf32>
    %90 = arith.mulf %83, %83 : vector<16x32xf32>
    %cst_54 = arith.constant dense<0.000000e+00> : vector<16xf32>
    %91 = vector.multi_reduction <add>, %90, %cst_54 [1] : vector<16x32xf32> to vector<16xf32>
    %92 = vector.shape_cast %91 : vector<16xf32> to vector<16x1xf32>
    %cst_55 = arith.constant 3.125000e-02 : f32
    %93 = vector.broadcast %cst_55 : f32 to vector<16x1xf32>
    %94 = arith.mulf %89, %93 : vector<16x1xf32>
    %cst_56 = arith.constant 3.125000e-02 : f32
    %95 = vector.broadcast %cst_56 : f32 to vector<16x1xf32>
    %96 = arith.mulf %92, %95 : vector<16x1xf32>
    %97 = arith.mulf %94, %94 : vector<16x1xf32>
    %98 = arith.subf %96, %97 : vector<16x1xf32>
    %cst_57 = arith.constant 0.000000e+00 : f32
    %99 = vector.broadcast %cst_57 : f32 to vector<16x1xf32>
    %100 = arith.maximumf %98, %99 : vector<16x1xf32>
    %101 = vector.broadcast %94 : vector<16x1xf32> to vector<16x32xf32>
    %102 = arith.subf %83, %101 : vector<16x32xf32>
    %cst_58 = arith.constant 9.99999974E-6 : f32
    %103 = vector.broadcast %cst_58 : f32 to vector<16x1xf32>
    %104 = arith.addf %100, %103 : vector<16x1xf32>
    %105 = math.rsqrt %104 : vector<16x1xf32>
    %106 = vector.broadcast %105 : vector<16x1xf32> to vector<16x32xf32>
    %107 = arith.mulf %102, %106 : vector<16x32xf32>
    %108 = vector.broadcast %85 : vector<1x32xf32> to vector<16x32xf32>
    %109 = arith.mulf %107, %108 : vector<16x32xf32>
    %110 = vector.broadcast %87 : vector<1x32xf32> to vector<16x32xf32>
    %111 = arith.addf %109, %110 : vector<16x32xf32>
    %112 = vector.shape_cast %111 : vector<16x32xf32> to vector<2x8x32xf32>
    %c0_59 = arith.constant 0 : index
    %c0_60 = arith.constant 0 : index
    %c0_61 = arith.constant 0 : index
    %113 = vector.load %arg15[%c0_59, %c0_60, %c0_61] : memref<2x8x32xf32, #tpu.memory_space<vmem>>, vector<2x8x32xf32>
    tpu.vector_store %arg15[%c0_59, %c0_60, %c0_61], %112 {strides = array<i32>} : memref<2x8x32xf32, #tpu.memory_space<vmem>>, vector<2x8x32xf32>,
    return
  }
  func.func @transform_0(%arg0: i32, %arg1: i32) -> (i32, i32, i32) {
    %c0_i32 = arith.constant 0 : i32
    %c0_i32_0 = arith.constant 0 : i32
    %c0_i32_1 = arith.constant 0 : i32
    return %arg0, %c0_i32, %c0_i32_0 : i32, i32, i32
  }
  func.func @transform_1(%arg0: i32, %arg1: i32) -> (i32, i32, i32) {
    %c0_i32 = arith.constant 0 : i32
    %c0_i32_0 = arith.constant 0 : i32
    %c0_i32_1 = arith.constant 0 : i32
    return %arg1, %c0_i32, %c0_i32_0 : i32, i32, i32
  }
  func.func @transform_2(%arg0: i32, %arg1: i32) -> (i32, i32, i32) {
    %c0_i32 = arith.constant 0 : i32
    %c0_i32_0 = arith.constant 0 : i32
    %c0_i32_1 = arith.constant 0 : i32
    return %arg1, %c0_i32, %c0_i32_0 : i32, i32, i32
  }
  func.func @transform_3(%arg0: i32, %arg1: i32) -> (i32, i32, i32) {
    %c0_i32 = arith.constant 0 : i32
    %c0_i32_0 = arith.constant 0 : i32
    %c0_i32_1 = arith.constant 0 : i32
    return %arg1, %c0_i32, %c0_i32_0 : i32, i32, i32
  }
  func.func @transform_4(%arg0: i32, %arg1: i32) -> (i32, i32, i32) {
    %c0_i32 = arith.constant 0 : i32
    %c0_i32_0 = arith.constant 0 : i32
    %c0_i32_1 = arith.constant 0 : i32
    return %arg1, %c0_i32, %c0_i32_0 : i32, i32, i32
  }
  func.func @transform_5(%arg0: i32, %arg1: i32) -> (i32, i32, i32) {
    %c0_i32 = arith.constant 0 : i32
    %c0_i32_0 = arith.constant 0 : i32
    %c0_i32_1 = arith.constant 0 : i32
    return %arg1, %c0_i32, %c0_i32_0 : i32, i32, i32
  }
  func.func @transform_6(%arg0: i32, %arg1: i32) -> (i32, i32, i32) {
    %c0_i32 = arith.constant 0 : i32
    %c0_i32_0 = arith.constant 0 : i32
    %c0_i32_1 = arith.constant 0 : i32
    return %arg1, %c0_i32, %c0_i32_0 : i32, i32, i32
  }
  func.func @transform_7(%arg0: i32, %arg1: i32) -> (i32, i32, i32) {
    %c0_i32 = arith.constant 0 : i32
    %c0_i32_0 = arith.constant 0 : i32
    %c0_i32_1 = arith.constant 0 : i32
    return %arg1, %c0_i32, %c0_i32_0 : i32, i32, i32
  }
  func.func @transform_8(%arg0: i32, %arg1: i32) -> (i32, i32, i32) {
    %c0_i32 = arith.constant 0 : i32
    %c0_i32_0 = arith.constant 0 : i32
    %c0_i32_1 = arith.constant 0 : i32
    return %arg1, %c0_i32, %c0_i32_0 : i32, i32, i32
  }
  func.func @transform_9(%arg0: i32, %arg1: i32) -> (i32, i32, i32) {
    %c0_i32 = arith.constant 0 : i32
    %c0_i32_0 = arith.constant 0 : i32
    %c0_i32_1 = arith.constant 0 : i32
    return %arg1, %c0_i32, %c0_i32_0 : i32, i32, i32
  }
  func.func @transform_10(%arg0: i32, %arg1: i32) -> (i32, i32, i32) {
    %c0_i32 = arith.constant 0 : i32
    %c0_i32_0 = arith.constant 0 : i32
    %c0_i32_1 = arith.constant 0 : i32
    return %arg1, %c0_i32, %c0_i32_0 : i32, i32, i32
  }
  func.func @transform_11(%arg0: i32, %arg1: i32) -> (i32, i32, i32) {
    %c0_i32 = arith.constant 0 : i32
    %c0_i32_0 = arith.constant 0 : i32
    %c0_i32_1 = arith.constant 0 : i32
    return %arg1, %c0_i32, %c0_i32_0 : i32, i32, i32
  }
  func.func @transform_12(%arg0: i32, %arg1: i32) -> (i32, i32, i32) {
    %c0_i32 = arith.constant 0 : i32
    %c0_i32_0 = arith.constant 0 : i32
    %c0_i32_1 = arith.constant 0 : i32
    return %arg1, %c0_i32, %c0_i32_0 : i32, i32, i32
  }
  func.func @transform_13(%arg0: i32, %arg1: i32) -> (i32, i32, i32) {
    %c0_i32 = arith.constant 0 : i32
    %c0_i32_0 = arith.constant 0 : i32
    %c0_i32_1 = arith.constant 0 : i32
    return %arg0, %c0_i32, %c0_i32_0 : i32, i32, i32
  }
}

</mosaic_0001>

<llo_original>
// kernel: tpu_custom_call.1
$region0: #{tpu_custom_call.1}
  #allocation0 [shape = 'u32[]', space=smem, size = 0x4, offset = 0x4, fixed_abs, tag = 'smem constant byte address 0x4 - core index']
  #allocation1 [shape = 'u32[144,128]{1,0:T(1,128)}', space=vmem, size = 0x12000, scoped, tag = 'internal scratch']
  %s0 = inlined_call_operand.hbm [shape: f32[2,8,32], index: 0, kind: input, shape index: {}]
  %s1 = inlined_call_operand.vmem [shape: f32[2,32,96], index: 1, kind: input, shape index: {}]
  %s2 = inlined_call_operand.vmem [shape: f32[2,1,96], index: 2, kind: input, shape index: {}]
  %s3 = inlined_call_operand.vmem [shape: f32[2,32,32], index: 3, kind: input, shape index: {}]
  %s4 = inlined_call_operand.vmem [shape: f32[2,1,32], index: 4, kind: input, shape index: {}]
  %s5 = inlined_call_operand.vmem [shape: f32[2,1,32], index: 5, kind: input, shape index: {}]
  %s6 = inlined_call_operand.vmem [shape: f32[2,1,32], index: 6, kind: input, shape index: {}]
  %s7 = inlined_call_operand.vmem [shape: f32[2,32,64], index: 7, kind: input, shape index: {}]
  %s8 = inlined_call_operand.vmem [shape: f32[2,1,64], index: 8, kind: input, shape index: {}]
  %s9 = inlined_call_operand.vmem [shape: f32[2,64,32], index: 9, kind: input, shape index: {}]
  %s10 = inlined_call_operand.vmem [shape: f32[2,1,32], index: 10, kind: input, shape index: {}]
  %s11 = inlined_call_operand.vmem [shape: f32[2,1,32], index: 11, kind: input, shape index: {}]
  %s12 = inlined_call_operand.vmem [shape: f32[2,1,32], index: 12, kind: input, shape index: {}]
  %s13 = inlined_call_operand.hbm [shape: f32[2,8,32], index: 13, kind: output, shape index: {}]
  %s14 = sld [smem:[#allocation0]]
  $region93: #{tpu_custom_call.1} parent=0
    _
  %s16 = ssub.s32 1, %s14
  %s17 = scalar_select 0, %s16, %s14
  $region1: #{tpu_custom_call.1} parent=0
    #allocation2 [shape = 'u8[8192]{0}', space=vmem, size = 0x2000, scoped, tag = 'input window, operand 0, single buffered']
    #allocation3 [shape = 's32[2]{0}', space=sflag, size = 0x8, scoped, tag = 'scoped memory for tpu_custom_call.1']
    #allocation4 [shape = 's32[2]{0}', space=sflag, size = 0x8, scoped, tag = 'scoped memory for tpu_custom_call.1']
    #allocation5 [shape = 'u8[8192]{0}', space=vmem, size = 0x2000, scoped, tag = 'output window, operand 0, single buffered']
    %18 = vsyncpa [#allocation3], 0
    %19 = vsyncpa [#allocation4], 0
    loop: start=0, step=1, limit=4
    $region2: #{tpu_custom_call.1} parent=1 // loop_pre_header
      _
    $region3: #{tpu_custom_call.1} parent=1 // loop_header
      %s21 = sphi 0, %s25
      %p22 = scmp.ge.s32.totalorder %s21, 4
      %s28 = sphi 0, %s40
      %s29 = sphi 0, %s36
      %s30 = sphi 0, %s28
      %s31 = sphi 0, %s29
      %s32 = sphi 0, %s30
      %s33 = sphi 0, %s31
      %s43 = sphi 0, %s45
      %s46 = sphi 0, %s43
      %s47 = sphi 0, %s46
      %s63 = sphi 0, %s47
      %s69 = sphi 0, %s71
      %s72 = sphi 0, %s69
      %s73 = sphi 0, %s72
      %s89 = sphi 0, %s73
      %s95 = sphi 0, %s97
      %s98 = sphi 0, %s95
      %s99 = sphi 0, %s98
      %s115 = sphi 0, %s99
      %s121 = sphi 0, %s123
      %s124 = sphi 0, %s121
      %s125 = sphi 0, %s124
      %s141 = sphi 0, %s125
      %s147 = sphi 0, %s149
      %s150 = sphi 0, %s147
      %s151 = sphi 0, %s150
      %s167 = sphi 0, %s151
      %s173 = sphi 0, %s175
      %s176 = sphi 0, %s173
      %s177 = sphi 0, %s176
      %s193 = sphi 0, %s177
      %s199 = sphi 0, %s201
      %s202 = sphi 0, %s199
      %s203 = sphi 0, %s202
      %s219 = sphi 0, %s203
      %s225 = sphi 0, %s227
      %s228 = sphi 0, %s225
      %s229 = sphi 0, %s228
      %s245 = sphi 0, %s229
      %s251 = sphi 0, %s253
      %s254 = sphi 0, %s251
      %s255 = sphi 0, %s254
      %s271 = sphi 0, %s255
      %s277 = sphi 0, %s279
      %s280 = sphi 0, %s277
      %s281 = sphi 0, %s280
      %s297 = sphi 0, %s281
      %s303 = sphi 0, %s305
      %s306 = sphi 0, %s303
      %s307 = sphi 0, %s306
      %s323 = sphi 0, %s307
      %s329 = sphi 0, %s331
      %s332 = sphi 0, %s329
      %s333 = sphi 0, %s332
      %s349 = sphi 0, %s333
      %s355 = sphi 0, %s357
      %s358 = sphi 0, %s355
      %s359 = sphi 0, %s358
      %s375 = sphi 0, %s359
      %s381 = sphi 0, %s383
      %s384 = sphi 0, %s381
      %s385 = sphi 0, %s384
      %s401 = sphi 0, %s385
    $region4: #{tpu_custom_call.1} parent=1 // loop_header_branch
      %24 = sbr.rel (%p22) target = $region8
    $region5: #{tpu_custom_call.1} parent=1 // loop_body
      %s26 = ssub.s32 %s21, 1
      %s27 = ssub.s32 %s21, 2
      %s34 = sadd.s32 1, %s29
      %p35 = scmp.ge.s32.totalorder %s34, 2
      %s36 = scalar_select %p35, 0, %s34
      %s37 = sadd.s32 1, %s28
      %s38 = scalar_select %p35, %s37, %s28
      %p39 = scmp.ge.s32.totalorder %s38, 1
      %s40 = scalar_select %p39, 0, %s38
      %s41 = ssub.s32 %s28, %s40
      %p42 = scmp.eq.s32.totalorder %s41, 0
      %s44 = sadd.s32 %s43, 1
      %s45 = scalar_select %p42, %s43, %s44
      %p48 = pneg %p42
      %p49 = scmp.eq.s32.totalorder %s21, 1
      %p50 = por %p48, %p49
      %p51 = scmp.ne.s32.totalorder %s43, %s46
      %p52 = scmp.eq.s32.totalorder %s21, 0
      %p53 = por %p51, %p52
      %p54 = scmp.ne.s32.totalorder %s43, %s46
      %p55 = scmp.eq.s32.totalorder %s26, 1
      %p56 = por %p54, %p55
      %p57 = scmp.ne.s32.totalorder %s46, %s47
      %p58 = scmp.eq.s32.totalorder %s26, 0
      %p59 = por %p57, %p58
      %p60 = scmp.ne.s32.totalorder %s46, %s47
      %p61 = scmp.eq.s32.totalorder %s27, 1
      %p62 = por %p60, %p61
      %p64 = scmp.ne.s32.totalorder %s47, %s63
      %p65 = scmp.eq.s32.totalorder %s27, 0
      %p66 = por %p64, %p65
      %s67 = ssub.s32 %s29, %s36
      %p68 = scmp.eq.s32.totalorder %s67, 0
      %s70 = sadd.s32 %s69, 1
      %s71 = scalar_select %p68, %s69, %s70
      %p74 = pneg %p68
      %p75 = scmp.eq.s32.totalorder %s21, 1
      %p76 = por %p74, %p75
      %p77 = scmp.ne.s32.totalorder %s69, %s72
      %p78 = scmp.eq.s32.totalorder %s21, 0
      %p79 = por %p77, %p78
      %p80 = scmp.ne.s32.totalorder %s69, %s72
      %p81 = scmp.eq.s32.totalorder %s26, 1
      %p82 = por %p80, %p81
      %p83 = scmp.ne.s32.totalorder %s72, %s73
      %p84 = scmp.eq.s32.totalorder %s26, 0
      %p85 = por %p83, %p84
      %p86 = scmp.ne.s32.totalorder %s72, %s73
      %p87 = scmp.eq.s32.totalorder %s27, 1
      %p88 = por %p86, %p87
      %p90 = scmp.ne.s32.totalorder %s73, %s89
      %p91 = scmp.eq.s32.totalorder %s27, 0
      %p92 = por %p90, %p91
      %s93 = ssub.s32 %s29, %s36
      %p94 = scmp.eq.s32.totalorder %s93, 0
      %s96 = sadd.s32 %s95, 1
      %s97 = scalar_select %p94, %s95, %s96
      %p100 = pneg %p94
      %p101 = scmp.eq.s32.totalorder %s21, 1
      %p102 = por %p100, %p101
      %p103 = scmp.ne.s32.totalorder %s95, %s98
      %p104 = scmp.eq.s32.totalorder %s21, 0
      %p105 = por %p103, %p104
      %p106 = scmp.ne.s32.totalorder %s95, %s98
      %p107 = scmp.eq.s32.totalorder %s26, 1
      %p108 = por %p106, %p107
      %p109 = scmp.ne.s32.totalorder %s98, %s99
      %p110 = scmp.eq.s32.totalorder %s26, 0
      %p111 = por %p109, %p110
      %p112 = scmp.ne.s32.totalorder %s98, %s99
      %p113 = scmp.eq.s32.totalorder %s27, 1
      %p114 = por %p112, %p113
      %p116 = scmp.ne.s32.totalorder %s99, %s115
      %p117 = scmp.eq.s32.totalorder %s27, 0
      %p118 = por %p116, %p117
      %s119 = ssub.s32 %s29, %s36
      %p120 = scmp.eq.s32.totalorder %s119, 0
      %s122 = sadd.s32 %s121, 1
      %s123 = scalar_select %p120, %s121, %s122
      %p126 = pneg %p120
      %p127 = scmp.eq.s32.totalorder %s21, 1
      %p128 = por %p126, %p127
      %p129 = scmp.ne.s32.totalorder %s121, %s124
      %p130 = scmp.eq.s32.totalorder %s21, 0
      %p131 = por %p129, %p130
      %p132 = scmp.ne.s32.totalorder %s121, %s124
      %p133 = scmp.eq.s32.totalorder %s26, 1
      %p134 = por %p132, %p133
      %p135 = scmp.ne.s32.totalorder %s124, %s125
      %p136 = scmp.eq.s32.totalorder %s26, 0
      %p137 = por %p135, %p136
      %p138 = scmp.ne.s32.totalorder %s124, %s125
      %p139 = scmp.eq.s32.totalorder %s27, 1
      %p140 = por %p138, %p139
      %p142 = scmp.ne.s32.totalorder %s125, %s141
      %p143 = scmp.eq.s32.totalorder %s27, 0
      %p144 = por %p142, %p143
      %s145 = ssub.s32 %s29, %s36
      %p146 = scmp.eq.s32.totalorder %s145, 0
      %s148 = sadd.s32 %s147, 1
      %s149 = scalar_select %p146, %s147, %s148
      %p152 = pneg %p146
      %p153 = scmp.eq.s32.totalorder %s21, 1
      %p154 = por %p152, %p153
      %p155 = scmp.ne.s32.totalorder %s147, %s150
      %p156 = scmp.eq.s32.totalorder %s21, 0
      %p157 = por %p155, %p156
      %p158 = scmp.ne.s32.totalorder %s147, %s150
      %p159 = scmp.eq.s32.totalorder %s26, 1
      %p160 = por %p158, %p159
      %p161 = scmp.ne.s32.totalorder %s150, %s151
      %p162 = scmp.eq.s32.totalorder %s26, 0
      %p163 = por %p161, %p162
      %p164 = scmp.ne.s32.totalorder %s150, %s151
      %p165 = scmp.eq.s32.totalorder %s27, 1
      %p166 = por %p164, %p165
      %p168 = scmp.ne.s32.totalorder %s151, %s167
      %p169 = scmp.eq.s32.totalorder %s27, 0
      %p170 = por %p168, %p169
      %s171 = ssub.s32 %s29, %s36
      %p172 = scmp.eq.s32.totalorder %s171, 0
      %s174 = sadd.s32 %s173, 1
      %s175 = scalar_select %p172, %s173, %s174
      %p178 = pneg %p172
      %p179 = scmp.eq.s32.totalorder %s21, 1
      %p180 = por %p178, %p179
      %p181 = scmp.ne.s32.totalorder %s173, %s176
      %p182 = scmp.eq.s32.totalorder %s21, 0
      %p183 = por %p181, %p182
      %p184 = scmp.ne.s32.totalorder %s173, %s176
      %p185 = scmp.eq.s32.totalorder %s26, 1
      %p186 = por %p184, %p185
      %p187 = scmp.ne.s32.totalorder %s176, %s177
      %p188 = scmp.eq.s32.totalorder %s26, 0
      %p189 = por %p187, %p188
      %p190 = scmp.ne.s32.totalorder %s176, %s177
      %p191 = scmp.eq.s32.totalorder %s27, 1
      %p192 = por %p190, %p191
      %p194 = scmp.ne.s32.totalorder %s177, %s193
      %p195 = scmp.eq.s32.totalorder %s27, 0
      %p196 = por %p194, %p195
      %s197 = ssub.s32 %s29, %s36
      %p198 = scmp.eq.s32.totalorder %s197, 0
      %s200 = sadd.s32 %s199, 1
      %s201 = scalar_select %p198, %s199, %s200
      %p204 = pneg %p198
      %p205 = scmp.eq.s32.totalorder %s21, 1
      %p206 = por %p204, %p205
      %p207 = scmp.ne.s32.totalorder %s199, %s202
      %p208 = scmp.eq.s32.totalorder %s21, 0
      %p209 = por %p207, %p208
      %p210 = scmp.ne.s32.totalorder %s199, %s202
      %p211 = scmp.eq.s32.totalorder %s26, 1
      %p212 = por %p210, %p211
      %p213 = scmp.ne.s32.totalorder %s202, %s203
      %p214 = scmp.eq.s32.totalorder %s26, 0
      %p215 = por %p213, %p214
      %p216 = scmp.ne.s32.totalorder %s202, %s203
      %p217 = scmp.eq.s32.totalorder %s27, 1
      %p218 = por %p216, %p217
      %p220 = scmp.ne.s32.totalorder %s203, %s219
      %p221 = scmp.eq.s32.totalorder %s27, 0
      %p222 = por %p220, %p221
      %s223 = ssub.s32 %s29, %s36
      %p224 = scmp.eq.s32.totalorder %s223, 0
      %s226 = sadd.s32 %s225, 1
      %s227 = scalar_select %p224, %s225, %s226
      %p230 = pneg %p224
      %p231 = scmp.eq.s32.totalorder %s21, 1
      %p232 = por %p230, %p231
      %p233 = scmp.ne.s32.totalorder %s225, %s228
      %p234 = scmp.eq.s32.totalorder %s21, 0
      %p235 = por %p233, %p234
      %p236 = scmp.ne.s32.totalorder %s225, %s228
      %p237 = scmp.eq.s32.totalorder %s26, 1
      %p238 = por %p236, %p237
      %p239 = scmp.ne.s32.totalorder %s228, %s229
      %p240 = scmp.eq.s32.totalorder %s26, 0
      %p241 = por %p239, %p240
      %p242 = scmp.ne.s32.totalorder %s228, %s229
      %p243 = scmp.eq.s32.totalorder %s27, 1
      %p244 = por %p242, %p243
      %p246 = scmp.ne.s32.totalorder %s229, %s245
      %p247 = scmp.eq.s32.totalorder %s27, 0
      %p248 = por %p246, %p247
      %s249 = ssub.s32 %s29, %s36
      %p250 = scmp.eq.s32.totalorder %s249, 0
      %s252 = sadd.s32 %s251, 1
      %s253 = scalar_select %p250, %s251, %s252
      %p256 = pneg %p250
      %p257 = scmp.eq.s32.totalorder %s21, 1
      %p258 = por %p256, %p257
      %p259 = scmp.ne.s32.totalorder %s251, %s254
      %p260 = scmp.eq.s32.totalorder %s21, 0
      %p261 = por %p259, %p260
      %p262 = scmp.ne.s32.totalorder %s251, %s254
      %p263 = scmp.eq.s32.totalorder %s26, 1
      %p264 = por %p262, %p263
      %p265 = scmp.ne.s32.totalorder %s254, %s255
      %p266 = scmp.eq.s32.totalorder %s26, 0
      %p267 = por %p265, %p266
      %p268 = scmp.ne.s32.totalorder %s254, %s255
      %p269 = scmp.eq.s32.totalorder %s27, 1
      %p270 = por %p268, %p269
      %p272 = scmp.ne.s32.totalorder %s255, %s271
      %p273 = scmp.eq.s32.totalorder %s27, 0
      %p274 = por %p272, %p273
      %s275 = ssub.s32 %s29, %s36
      %p276 = scmp.eq.s32.totalorder %s275, 0
      %s278 = sadd.s32 %s277, 1
      %s279 = scalar_select %p276, %s277, %s278
      %p282 = pneg %p276
      %p283 = scmp.eq.s32.totalorder %s21, 1
      %p284 = por %p282, %p283
      %p285 = scmp.ne.s32.totalorder %s277, %s280
      %p286 = scmp.eq.s32.totalorder %s21, 0
      %p287 = por %p285, %p286
      %p288 = scmp.ne.s32.totalorder %s277, %s280
      %p289 = scmp.eq.s32.totalorder %s26, 1
      %p290 = por %p288, %p289
      %p291 = scmp.ne.s32.totalorder %s280, %s281
      %p292 = scmp.eq.s32.totalorder %s26, 0
      %p293 = por %p291, %p292
      %p294 = scmp.ne.s32.totalorder %s280, %s281
      %p295 = scmp.eq.s32.totalorder %s27, 1
      %p296 = por %p294, %p295
      %p298 = scmp.ne.s32.totalorder %s281, %s297
      %p299 = scmp.eq.s32.totalorder %s27, 0
      %p300 = por %p298, %p299
      %s301 = ssub.s32 %s29, %s36
      %p302 = scmp.eq.s32.totalorder %s301, 0
      %s304 = sadd.s32 %s303, 1
      %s305 = scalar_select %p302, %s303, %s304
      %p308 = pneg %p302
      %p309 = scmp.eq.s32.totalorder %s21, 1
      %p310 = por %p308, %p309
      %p311 = scmp.ne.s32.totalorder %s303, %s306
      %p312 = scmp.eq.s32.totalorder %s21, 0
      %p313 = por %p311, %p312
      %p314 = scmp.ne.s32.totalorder %s303, %s306
      %p315 = scmp.eq.s32.totalorder %s26, 1
      %p316 = por %p314, %p315
      %p317 = scmp.ne.s32.totalorder %s306, %s307
      %p318 = scmp.eq.s32.totalorder %s26, 0
      %p319 = por %p317, %p318
      %p320 = scmp.ne.s32.totalorder %s306, %s307
      %p321 = scmp.eq.s32.totalorder %s27, 1
      %p322 = por %p320, %p321
      %p324 = scmp.ne.s32.totalorder %s307, %s323
      %p325 = scmp.eq.s32.totalorder %s27, 0
      %p326 = por %p324, %p325
      %s327 = ssub.s32 %s29, %s36
      %p328 = scmp.eq.s32.totalorder %s327, 0
      %s330 = sadd.s32 %s329, 1
      %s331 = scalar_select %p328, %s329, %s330
      %p334 = pneg %p328
      %p335 = scmp.eq.s32.totalorder %s21, 1
      %p336 = por %p334, %p335
      %p337 = scmp.ne.s32.totalorder %s329, %s332
      %p338 = scmp.eq.s32.totalorder %s21, 0
      %p339 = por %p337, %p338
      %p340 = scmp.ne.s32.totalorder %s329, %s332
      %p341 = scmp.eq.s32.totalorder %s26, 1
      %p342 = por %p340, %p341
      %p343 = scmp.ne.s32.totalorder %s332, %s333
      %p344 = scmp.eq.s32.totalorder %s26, 0
      %p345 = por %p343, %p344
      %p346 = scmp.ne.s32.totalorder %s332, %s333
      %p347 = scmp.eq.s32.totalorder %s27, 1
      %p348 = por %p346, %p347
      %p350 = scmp.ne.s32.totalorder %s333, %s349
      %p351 = scmp.eq.s32.totalorder %s27, 0
      %p352 = por %p350, %p351
      %s353 = ssub.s32 %s29, %s36
      %p354 = scmp.eq.s32.totalorder %s353, 0
      %s356 = sadd.s32 %s355, 1
      %s357 = scalar_select %p354, %s355, %s356
      %p360 = pneg %p354
      %p361 = scmp.eq.s32.totalorder %s21, 1
      %p362 = por %p360, %p361
      %p363 = scmp.ne.s32.totalorder %s355, %s358
      %p364 = scmp.eq.s32.totalorder %s21, 0
      %p365 = por %p363, %p364
      %p366 = scmp.ne.s32.totalorder %s355, %s358
      %p367 = scmp.eq.s32.totalorder %s26, 1
      %p368 = por %p366, %p367
      %p369 = scmp.ne.s32.totalorder %s358, %s359
      %p370 = scmp.eq.s32.totalorder %s26, 0
      %p371 = por %p369, %p370
      %p372 = scmp.ne.s32.totalorder %s358, %s359
      %p373 = scmp.eq.s32.totalorder %s27, 1
      %p374 = por %p372, %p373
      %p376 = scmp.ne.s32.totalorder %s359, %s375
      %p377 = scmp.eq.s32.totalorder %s27, 0
      %p378 = por %p376, %p377
      %s379 = ssub.s32 %s28, %s40
      %p380 = scmp.eq.s32.totalorder %s379, 0
      %s382 = sadd.s32 %s381, 1
      %s383 = scalar_select %p380, %s381, %s382
      %p386 = pneg %p380
      %p387 = scmp.eq.s32.totalorder %s21, 1
      %p388 = por %p386, %p387
      %p389 = scmp.ne.s32.totalorder %s381, %s384
      %p390 = scmp.eq.s32.totalorder %s21, 0
      %p391 = por %p389, %p390
      %p392 = scmp.ne.s32.totalorder %s381, %s384
      %p393 = scmp.eq.s32.totalorder %s26, 1
      %p394 = por %p392, %p393
      %p395 = scmp.ne.s32.totalorder %s384, %s385
      %p396 = scmp.eq.s32.totalorder %s26, 0
      %p397 = por %p395, %p396
      %p398 = scmp.ne.s32.totalorder %s384, %s385
      %p399 = scmp.eq.s32.totalorder %s27, 1
      %p400 = por %p398, %p399
      %p402 = scmp.ne.s32.totalorder %s385, %s401
      %p403 = scmp.eq.s32.totalorder %s27, 0
      %p404 = por %p402, %p403
      %p405 = scmp.le.s32.totalorder 1, %s21
      %p406 = scmp.lt.s32.totalorder %s21, 3
      %p407 = pnand %p405, %p406
      %p408 = pneg %p407
      // Predicated region
      $region9: #{tpu_custom_call.1} parent=5 // pred_check
        _
      $region10: #{tpu_custom_call.1} parent=5 // pred_check_branch
        %410 = sbr.rel (%p407) target = $region12
      $region11: #{tpu_custom_call.1} parent=5 // pred_region
        %s411 = ssub.s32 %s21, 1
        // Predicated region
        $region13: #{tpu_custom_call.1} parent=11 // pred_check
          %p412 = pneg %p59
        $region14: #{tpu_custom_call.1} parent=11 // pred_check_branch
          %414 = sbr.rel (%p412) target = $region16
        $region15: #{tpu_custom_call.1} parent=11 // pred_region
          %s415 = smul.u32 2, %s30
          %s417 = ssub.s32 256, 256
          %418 = vsyncadd [#allocation3], %s417
          %s419 = smul.addr %s415, 128
          %s420 = scalar_lea.hbm %s0, %s419
          %s421 = sshll.u32 [#allocation2], 4
          %s422 = int_to_ptr.vmem [resolvable:$true] %s421
          %427 = dma.hbm_to_vmem [thread:$0]  %s420, 256, %s422, [#allocation3], 128, 128, 8
        $region16: #{tpu_custom_call.1} parent=11 // pred_fallthru
          _
      $region12: #{tpu_custom_call.1} parent=5 // pred_fallthru
        _
      %p428 = scmp.lt.s32.totalorder %s21, 2
      // Predicated region
      $region17: #{tpu_custom_call.1} parent=5 // pred_check
        %p429 = pneg %p428
      $region18: #{tpu_custom_call.1} parent=5 // pred_check_branch
        %431 = sbr.rel (%p429) target = $region20
      $region19: #{tpu_custom_call.1} parent=5 // pred_region
        // Predicated region
        $region21: #{tpu_custom_call.1} parent=19 // pred_check
          %p432 = pneg %p79
        $region22: #{tpu_custom_call.1} parent=19 // pred_check_branch
          %434 = sbr.rel (%p432) target = $region24
        $region23: #{tpu_custom_call.1} parent=19 // pred_region
          %p435 = scmp.lt.s32.totalorder %s29, 1
          %s436 = scalar_select %p435, %s29, 1
          %s437 = smul.addr %s436, 4
          %s438 = smul.addr %s437, 8
          %s439 = scalar_lea.vmem %s1, %s438
        $region24: #{tpu_custom_call.1} parent=19 // pred_fallthru
          _
        // Predicated region
        $region25: #{tpu_custom_call.1} parent=19 // pred_check
          %p440 = pneg %p105
        $region26: #{tpu_custom_call.1} parent=19 // pred_check_branch
          %442 = sbr.rel (%p440) target = $region28
        $region27: #{tpu_custom_call.1} parent=19 // pred_region
          %p443 = scmp.lt.s32.totalorder %s29, 1
          %s444 = scalar_select %p443, %s29, 1
          %s445 = scalar_lea.vmem %s2, %s444
        $region28: #{tpu_custom_call.1} parent=19 // pred_fallthru
          _
        // Predicated region
        $region29: #{tpu_custom_call.1} parent=19 // pred_check
          %p446 = pneg %p131
        $region30: #{tpu_custom_call.1} parent=19 // pred_check_branch
          %448 = sbr.rel (%p446) target = $region32
        $region31: #{tpu_custom_call.1} parent=19 // pred_region
          %p449 = scmp.lt.s32.totalorder %s29, 1
          %s450 = scalar_select %p449, %s29, 1
          %s451 = smul.addr %s450, 4
          %s452 = smul.addr %s451, 8
          %s453 = scalar_lea.vmem %s3, %s452
        $region32: #{tpu_custom_call.1} parent=19 // pred_fallthru
          _
        // Predicated region
        $region33: #{tpu_custom_call.1} parent=19 // pred_check
          %p454 = pneg %p157
        $region34: #{tpu_custom_call.1} parent=19 // pred_check_branch
          %456 = sbr.rel (%p454) target = $region36
        $region35: #{tpu_custom_call.1} parent=19 // pred_region
          %p457 = scmp.lt.s32.totalorder %s29, 1
          %s458 = scalar_select %p457, %s29, 1
          %s459 = scalar_lea.vmem %s4, %s458
        $region36: #{tpu_custom_call.1} parent=19 // pred_fallthru
          _
        // Predicated region
        $region37: #{tpu_custom_call.1} parent=19 // pred_check
          %p460 = pneg %p183
        $region38: #{tpu_custom_call.1} parent=19 // pred_check_branch
          %462 = sbr.rel (%p460) target = $region40
        $region39: #{tpu_custom_call.1} parent=19 // pred_region
          %p463 = scmp.lt.s32.totalorder %s29, 1
          %s464 = scalar_select %p463, %s29, 1
          %s465 = scalar_lea.vmem %s5, %s464
        $region40: #{tpu_custom_call.1} parent=19 // pred_fallthru
          _
        // Predicated region
        $region41: #{tpu_custom_call.1} parent=19 // pred_check
          %p466 = pneg %p209
        $region42: #{tpu_custom_call.1} parent=19 // pred_check_branch
          %468 = sbr.rel (%p466) target = $region44
        $region43: #{tpu_custom_call.1} parent=19 // pred_region
          %p469 = scmp.lt.s32.totalorder %s29, 1
          %s470 = scalar_select %p469, %s29, 1
          %s471 = scalar_lea.vmem %s6, %s470
        $region44: #{tpu_custom_call.1} parent=19 // pred_fallthru
          _
        // Predicated region
        $region45: #{tpu_custom_call.1} parent=19 // pred_check
          %p472 = pneg %p235
        $region46: #{tpu_custom_call.1} parent=19 // pred_check_branch
          %474 = sbr.rel (%p472) target = $region48
        $region47: #{tpu_custom_call.1} parent=19 // pred_region
          %p475 = scmp.lt.s32.totalorder %s29, 1
          %s476 = scalar_select %p475, %s29, 1
          %s477 = smul.addr %s476, 4
          %s478 = smul.addr %s477, 8
          %s479 = scalar_lea.vmem %s7, %s478
        $region48: #{tpu_custom_call.1} parent=19 // pred_fallthru
          _
        // Predicated region
        $region49: #{tpu_custom_call.1} parent=19 // pred_check
          %p480 = pneg %p261
        $region50: #{tpu_custom_call.1} parent=19 // pred_check_branch
          %482 = sbr.rel (%p480) target = $region52
        $region51: #{tpu_custom_call.1} parent=19 // pred_region
          %p483 = scmp.lt.s32.totalorder %s29, 1
          %s484 = scalar_select %p483, %s29, 1
          %s485 = scalar_lea.vmem %s8, %s484
        $region52: #{tpu_custom_call.1} parent=19 // pred_fallthru
          _
        // Predicated region
        $region53: #{tpu_custom_call.1} parent=19 // pred_check
          %p486 = pneg %p287
        $region54: #{tpu_custom_call.1} parent=19 // pred_check_branch
          %488 = sbr.rel (%p486) target = $region56
        $region55: #{tpu_custom_call.1} parent=19 // pred_region
          %p489 = scmp.lt.s32.totalorder %s29, 1
          %s490 = scalar_select %p489, %s29, 1
          %s491 = smul.addr %s490, 8
          %s492 = smul.addr %s491, 8
          %s493 = scalar_lea.vmem %s9, %s492
        $region56: #{tpu_custom_call.1} parent=19 // pred_fallthru
          _
        // Predicated region
        $region57: #{tpu_custom_call.1} parent=19 // pred_check
          %p494 = pneg %p313
        $region58: #{tpu_custom_call.1} parent=19 // pred_check_branch
          %496 = sbr.rel (%p494) target = $region60
        $region59: #{tpu_custom_call.1} parent=19 // pred_region
          %p497 = scmp.lt.s32.totalorder %s29, 1
          %s498 = scalar_select %p497, %s29, 1
          %s499 = scalar_lea.vmem %s10, %s498
        $region60: #{tpu_custom_call.1} parent=19 // pred_fallthru
          _
        // Predicated region
        $region61: #{tpu_custom_call.1} parent=19 // pred_check
          %p500 = pneg %p339
        $region62: #{tpu_custom_call.1} parent=19 // pred_check_branch
          %502 = sbr.rel (%p500) target = $region64
        $region63: #{tpu_custom_call.1} parent=19 // pred_region
          %p503 = scmp.lt.s32.totalorder %s29, 1
          %s504 = scalar_select %p503, %s29, 1
          %s505 = scalar_lea.vmem %s11, %s504
        $region64: #{tpu_custom_call.1} parent=19 // pred_fallthru
          _
        // Predicated region
        $region65: #{tpu_custom_call.1} parent=19 // pred_check
          %p506 = pneg %p365
        $region66: #{tpu_custom_call.1} parent=19 // pred_check_branch
          %508 = sbr.rel (%p506) target = $region68
        $region67: #{tpu_custom_call.1} parent=19 // pred_region
          %p509 = scmp.lt.s32.totalorder %s29, 1
          %s510 = scalar_select %p509, %s29, 1
          %s511 = scalar_lea.vmem %s12, %s510
        $region68: #{tpu_custom_call.1} parent=19 // pred_fallthru
          _
      $region20: #{tpu_custom_call.1} parent=5 // pred_fallthru
        _
      %p512 = scmp.le.s32.totalorder 1, %s21
      %p513 = scmp.lt.s32.totalorder %s21, 3
      %p514 = pnand %p512, %p513
      %p515 = pneg %p514
      // Predicated region
      $region69: #{tpu_custom_call.1} parent=5 // pred_check
        _
      $region70: #{tpu_custom_call.1} parent=5 // pred_check_branch
        %517 = sbr.rel (%p514) target = $region72
      $region71: #{tpu_custom_call.1} parent=5 // pred_region
        %s518 = ssub.s32 %s21, 1
        // Predicated region
        $region73: #{tpu_custom_call.1} parent=71 // pred_check
          %p519 = pneg %p59
        $region74: #{tpu_custom_call.1} parent=71 // pred_check_branch
          %521 = sbr.rel (%p519) target = $region76
        $region75: #{tpu_custom_call.1} parent=71 // pred_region
          %522 = dma.done [#allocation3], 256
        $region76: #{tpu_custom_call.1} parent=71 // pred_fallthru
          _
        %p523 = pneg %p59
        %p524 = pneg %p56
        %p525 = scmp.lt.s32.totalorder %s31, 1
        %s526 = scalar_select %p525, %s31, 1
        %s527 = smul.addr %s526, 4
        %s528 = smul.addr %s527, 8
        %s529 = scalar_lea.vmem %s1, %s528
        %p530 = pneg %p85
        %p531 = pneg %p82
        %p532 = scmp.lt.s32.totalorder %s31, 1
        %s533 = scalar_select %p532, %s31, 1
        %s534 = scalar_lea.vmem %s2, %s533
        %p535 = pneg %p111
        %p536 = pneg %p108
        %p537 = scmp.lt.s32.totalorder %s31, 1
        %s538 = scalar_select %p537, %s31, 1
        %s539 = smul.addr %s538, 4
        %s540 = smul.addr %s539, 8
        %s541 = scalar_lea.vmem %s3, %s540
        %p542 = pneg %p137
        %p543 = pneg %p134
        %p544 = scmp.lt.s32.totalorder %s31, 1
        %s545 = scalar_select %p544, %s31, 1
        %s546 = scalar_lea.vmem %s4, %s545
        %p547 = pneg %p163
        %p548 = pneg %p160
        %p549 = scmp.lt.s32.totalorder %s31, 1
        %s550 = scalar_select %p549, %s31, 1
        %s551 = scalar_lea.vmem %s5, %s550
        %p552 = pneg %p189
        %p553 = pneg %p186
        %p554 = scmp.lt.s32.totalorder %s31, 1
        %s555 = scalar_select %p554, %s31, 1
        %s556 = scalar_lea.vmem %s6, %s555
        %p557 = pneg %p215
        %p558 = pneg %p212
        %p559 = scmp.lt.s32.totalorder %s31, 1
        %s560 = scalar_select %p559, %s31, 1
        %s561 = smul.addr %s560, 4
        %s562 = smul.addr %s561, 8
        %s563 = scalar_lea.vmem %s7, %s562
        %p564 = pneg %p241
        %p565 = pneg %p238
        %p566 = scmp.lt.s32.totalorder %s31, 1
        %s567 = scalar_select %p566, %s31, 1
        %s568 = scalar_lea.vmem %s8, %s567
        %p569 = pneg %p267
        %p570 = pneg %p264
        %p571 = scmp.lt.s32.totalorder %s31, 1
        %s572 = scalar_select %p571, %s31, 1
        %s573 = smul.addr %s572, 8
        %s574 = smul.addr %s573, 8
        %s575 = scalar_lea.vmem %s9, %s574
        %p576 = pneg %p293
        %p577 = pneg %p290
        %p578 = scmp.lt.s32.totalorder %s31, 1
        %s579 = scalar_select %p578, %s31, 1
        %s580 = scalar_lea.vmem %s10, %s579
        %p581 = pneg %p319
        %p582 = pneg %p316
        %p583 = scmp.lt.s32.totalorder %s31, 1
        %s584 = scalar_select %p583, %s31, 1
        %s585 = scalar_lea.vmem %s11, %s584
        %p586 = pneg %p345
        %p587 = pneg %p342
        %p588 = scmp.lt.s32.totalorder %s31, 1
        %s589 = scalar_select %p588, %s31, 1
        %s590 = scalar_lea.vmem %s12, %s589
        %p591 = pneg %p371
        %p592 = pneg %p368
        %p593 = pneg %p397
        %p594 = pneg %p394
        %s595 = smul.u32 2, %s30
        %p596 = scmp.lt.s32.totalorder %s31, 1
        %s597 = scalar_select %p596, %s31, 1
        %s598 = smul.addr %s597, 4
        %s599 = smul.addr %s598, 8
        %s600 = scalar_lea.vmem %s1, %s599
        %p601 = scmp.lt.s32.totalorder %s31, 1
        %s602 = scalar_select %p601, %s31, 1
        %s603 = scalar_lea.vmem %s2, %s602
        %p604 = scmp.lt.s32.totalorder %s31, 1
        %s605 = scalar_select %p604, %s31, 1
        %s606 = smul.addr %s605, 4
        %s607 = smul.addr %s606, 8
        %s608 = scalar_lea.vmem %s3, %s607
        %p609 = scmp.lt.s32.totalorder %s31, 1
        %s610 = scalar_select %p609, %s31, 1
        %s611 = scalar_lea.vmem %s4, %s610
        %p612 = scmp.lt.s32.totalorder %s31, 1
        %s613 = scalar_select %p612, %s31, 1
        %s614 = scalar_lea.vmem %s5, %s613
        %p615 = scmp.lt.s32.totalorder %s31, 1
        %s616 = scalar_select %p615, %s31, 1
        %s617 = scalar_lea.vmem %s6, %s616
        %p618 = scmp.lt.s32.totalorder %s31, 1
        %s619 = scalar_select %p618, %s31, 1
        %s620 = smul.addr %s619, 4
        %s621 = smul.addr %s620, 8
        %s622 = scalar_lea.vmem %s7, %s621
        %p623 = scmp.lt.s32.totalorder %s31, 1
        %s624 = scalar_select %p623, %s31, 1
        %s625 = scalar_lea.vmem %s8, %s624
        %p626 = scmp.lt.s32.totalorder %s31, 1
        %s627 = scalar_select %p626, %s31, 1
        %s628 = smul.addr %s627, 8
        %s629 = smul.addr %s628, 8
        %s630 = scalar_lea.vmem %s9, %s629
        %p631 = scmp.lt.s32.totalorder %s31, 1
        %s632 = scalar_select %p631, %s31, 1
        %s633 = scalar_lea.vmem %s10, %s632
        %p634 = scmp.lt.s32.totalorder %s31, 1
        %s635 = scalar_select %p634, %s31, 1
        %s636 = scalar_lea.vmem %s11, %s635
        %p637 = scmp.lt.s32.totalorder %s31, 1
        %s638 = scalar_select %p637, %s31, 1
        %s639 = scalar_lea.vmem %s12, %s638
        %s640 = smul.u32 2, %s30
        %p641 = scmp.eq.s32.totalorder %s31, 0
        // Predicated region
        $region77: #{tpu_custom_call.1} parent=71 // pred_check
          %p642 = pneg %p641
        $region78: #{tpu_custom_call.1} parent=71 // pred_check_branch
          %644 = sbr.rel (%p642) target = $region80
        $region79: #{tpu_custom_call.1} parent=71 // pred_region
          %v645 = vld [vmem:[#allocation2] sm:$0xff]
          %v646 = vld [vmem:[#allocation2 + $0x8] sm:$0xff]
          %vm647 = vcmask 261120
          %648 = vst.msk [vmem:[#allocation5] sm:$0xff] %vm647, %v645
          %649 = vst.msk [vmem:[#allocation5 + $0x8] sm:$0xff] %vm647, %v646
        $region80: #{tpu_custom_call.1} parent=71 // pred_fallthru
          _
        %v650 = vld [vmem:[#allocation5] sm:$0xff]
        %v651 = vld [vmem:[#allocation5 + $0x8] sm:$0xff]
        %v652 = vld [vmem:[%s600] sm:$0xff]
        %v653 = vld [vmem:[%s600 + $0x8] sm:$0xff]
        %v654 = vld [vmem:[%s600 + $0x10] sm:$0xff]
        %v655 = vld [vmem:[%s600 + $0x18] sm:$0xff]
        %v656 = vld [vmem:[%s603] sm:$0x1]
        %v658 = vlaneseq
        %v659 = vshrl.u32 %v658, 7
        %v660 = vsub.s32 0, %v659
        %v661 = vrot.slane %v656, %v660
        %vm663 = vcmask 261120
        %v665 = vsel %vm663, %v650, 0
        %v668 = vsel %vm663, %v651, 0
        %670 = vmatprep.subr.mxu0 0.0
        %671 = vmatpush1.msra.mxu0 %v652
        %672 = vmatprep.subr.mxu0 0.0
        %673 = vmatpush1.msra.mxu0 %v653
        %674 = vmatprep.subr.mxu0 0.0
        %675 = vmatpush1.msra.mxu0 %v654
        %676 = vmatprep.subr.mxu0 0.0
        %677 = vmatpush1.msra.mxu0 %v655
        %678 = vmatprep.subr.mxu0 0.0
        %679 = vmatpush1.msra.mxu0 0.0
        %680 = vmatprep.subr.mxu0 0.0
        %681 = vmatpush1.msra.mxu0 0.0
        %682 = vmatprep.subr.mxu0 0.0
        %683 = vmatpush1.msra.mxu0 0.0
        %684 = vmatprep.subr.mxu0 0.0
        %685 = vmatpush1.msra.mxu0 0.0
        %686 = vmatprep.subr.mxu0 0.0
        %687 = vmatpush1.msra.mxu0 0.0
        %688 = vmatprep.subr.mxu0 0.0
        %689 = vmatpush1.msra.mxu0 0.0
        %690 = vmatprep.subr.mxu0 0.0
        %691 = vmatpush1.msra.mxu0 0.0
        %692 = vmatprep.subr.mxu0 0.0
        %693 = vmatpush1.msra.mxu0 0.0
        %694 = vmatprep.subr.mxu0 0.0
        %695 = vmatpush1.msra.mxu0 0.0
        %696 = vmatprep.subr.mxu0 0.0
        %697 = vmatpush1.msra.mxu0 0.0
        %698 = vmatprep.subr.mxu0 0.0
        %699 = vmatpush1.msra.mxu0 0.0
        %700 = vmatprep.subr.mxu0 0.0
        %701 = vmatpush1.msra.mxu0 0.0
        %702 = vmatprep.subr.mxu0 0.0
        %703 = vmatpush1.msra.mxu0 0.0
        %704 = vmatprep.subr.mxu0 0.0
        %705 = vmatpush1.msra.mxu0 0.0
        %706 = vmatprep.subr.mxu0 0.0
        %707 = vmatpush1.msra.mxu0 0.0
        %708 = vmatprep.subr.mxu0 0.0
        %709 = vmatpush1.msra.mxu0 0.0
        %710 = vmatprep.subr.mxu0 0.0
        %711 = vmatpush1.msra.mxu0 0.0
        %712 = vmatprep.subr.mxu0 0.0
        %713 = vmatpush1.msra.mxu0 0.0
        %714 = vmatprep.subr.mxu0 0.0
        %715 = vmatpush1.msra.mxu0 0.0
        %716 = vmatprep.subr.mxu0 0.0
        %717 = vmatpush1.msra.mxu0 0.0
        %718 = vmatprep.subr.mxu0 0.0
        %719 = vmatpush1.msra.mxu0 0.0
        %720 = vmatprep.subr.mxu0 0.0
        %721 = vmatpush1.msra.mxu0 0.0
        %722 = vmatprep.subr.mxu0 0.0
        %723 = vmatpush1.msra.mxu0 0.0
        %724 = vmatprep.subr.mxu0 0.0
        %725 = vmatpush1.msra.mxu0 0.0
        %726 = vmatprep.subr.mxu0 0.0
        %727 = vmatpush1.msra.mxu0 0.0
        %728 = vmatprep.subr.mxu0 0.0
        %729 = vmatpush1.msra.mxu0 0.0
        %730 = vmatprep.subr.mxu0 0.0
        %731 = vmatpush1.msra.mxu0 0.0
        %732 = vmatprep.subr.mxu0 0.0
        %733 = vmatpush1.msra.mxu0 0.0
        %734 = vmatprep.mubr.f32.mxu0 0.0
        %735 = vmatmul.mubr.f32.gmra.mrb[0].mxu0 %v665
        %v736 = vpop.f32.mrb[0].mxu0
        %v737 = vadd.f32 %v661, %v736
        %v738 = vpop.f32.mrb[0].mxu0
        %739 = vmatprep.mubr.f32.mxu0 0.0
        %740 = vmatmul.mubr.f32.gmra.mrb[0].mxu0 %v668
        %v741 = vpop.f32.mrb[0].mxu0
        %v742 = vadd.f32 %v661, %v741
        %v743 = vpop.f32.mrb[0].mxu0
        %744 = vdwg.mxu0
        %746 = vrot.lane.b32.xlu0 %v737, 96
        %v747 = vpop.permute.xlu0 %746
        %v748 = vsel %vm663, %v737, 0
        %v750 = vsel %vm663, %v747, 0
        %752 = vmatprep.subr.mxu0 0.0
        %753 = vmatpush1.xpose.msra.mxu0 %v750
        %754 = vmatprep.subr.mxu0 0.0
        %755 = vmatpush1.xpose.msra.mxu0 0.0
        %756 = vmatprep.subr.mxu0 0.0
        %757 = vmatpush1.xpose.msra.mxu0 0.0
        %758 = vmatprep.subr.mxu0 0.0
        %759 = vmatpush1.xpose.msra.mxu0 0.0
        %760 = vmatprep.subr.mxu0 0.0
        %761 = vmatpush1.xpose.msra.mxu0 0.0
        %762 = vmatprep.subr.mxu0 0.0
        %763 = vmatpush1.xpose.msra.mxu0 0.0
        %764 = vmatprep.subr.mxu0 0.0
        %765 = vmatpush1.xpose.msra.mxu0 0.0
        %766 = vmatprep.subr.mxu0 0.0
        %767 = vmatpush1.xpose.msra.mxu0 0.0
        %768 = vmatprep.subr.mxu0 0.0
        %769 = vmatpush1.xpose.msra.mxu0 0.0
        %770 = vmatprep.subr.mxu0 0.0
        %771 = vmatpush1.xpose.msra.mxu0 0.0
        %772 = vmatprep.subr.mxu0 0.0
        %773 = vmatpush1.xpose.msra.mxu0 0.0
        %774 = vmatprep.subr.mxu0 0.0
        %775 = vmatpush1.xpose.msra.mxu0 0.0
        %776 = vmatprep.subr.mxu0 0.0
        %777 = vmatpush1.xpose.msra.mxu0 0.0
        %778 = vmatprep.subr.mxu0 0.0
        %779 = vmatpush1.xpose.msra.mxu0 0.0
        %780 = vmatprep.subr.mxu0 0.0
        %781 = vmatpush1.xpose.msra.mxu0 0.0
        %782 = vmatprep.subr.mxu0 0.0
        %783 = vmatpush1.xpose.msra.mxu0 0.0
        %784 = vmatprep.subr.mxu0 0.0
        %785 = vmatpush1.xpose.msra.mxu0 0.0
        %786 = vmatprep.subr.mxu0 0.0
        %787 = vmatpush1.xpose.msra.mxu0 0.0
        %788 = vmatprep.subr.mxu0 0.0
        %789 = vmatpush1.xpose.msra.mxu0 0.0
        %790 = vmatprep.subr.mxu0 0.0
        %791 = vmatpush1.xpose.msra.mxu0 0.0
        %792 = vmatprep.subr.mxu0 0.0
        %793 = vmatpush1.xpose.msra.mxu0 0.0
        %794 = vmatprep.subr.mxu0 0.0
        %795 = vmatpush1.xpose.msra.mxu0 0.0
        %796 = vmatprep.subr.mxu0 0.0
        %797 = vmatpush1.xpose.msra.mxu0 0.0
        %798 = vmatprep.subr.mxu0 0.0
        %799 = vmatpush1.xpose.msra.mxu0 0.0
        %800 = vmatprep.subr.mxu0 0.0
        %801 = vmatpush1.xpose.msra.mxu0 0.0
        %802 = vmatprep.subr.mxu0 0.0
        %803 = vmatpush1.xpose.msra.mxu0 0.0
        %804 = vmatprep.subr.mxu0 0.0
        %805 = vmatpush1.xpose.msra.mxu0 0.0
        %806 = vmatprep.subr.mxu0 0.0
        %807 = vmatpush1.xpose.msra.mxu0 0.0
        %808 = vmatprep.subr.mxu0 0.0
        %809 = vmatpush1.xpose.msra.mxu0 0.0
        %810 = vmatprep.subr.mxu0 0.0
        %811 = vmatpush1.xpose.msra.mxu0 0.0
        %812 = vmatprep.subr.mxu0 0.0
        %813 = vmatpush1.xpose.msra.mxu0 0.0
        %814 = vmatprep.subr.mxu0 0.0
        %815 = vmatpush1.xpose.msra.mxu0 0.0
        %816 = vmatprep.mubr.f32.mxu0 0.0
        %817 = vmatmul.mubr.f32.gmra.mrb[0].mxu0 %v748
        %v818 = vpop.f32.mrb[0].mxu0
        %v819 = vadd.f32 0.0, %v818
        %v820 = vpop.f32.mrb[0].mxu0
        %821 = vdwg.mxu0
        %823 = vrot.lane.b32.xlu0 %v742, 96
        %v824 = vpop.permute.xlu0 %823
        %v825 = vsel %vm663, %v742, 0
        %v827 = vsel %vm663, %v824, 0
        %829 = vmatprep.subr.mxu0 0.0
        %830 = vmatpush1.xpose.msra.mxu0 %v827
        %831 = vmatprep.subr.mxu0 0.0
        %832 = vmatpush1.xpose.msra.mxu0 0.0
        %833 = vmatprep.subr.mxu0 0.0
        %834 = vmatpush1.xpose.msra.mxu0 0.0
        %835 = vmatprep.subr.mxu0 0.0
        %836 = vmatpush1.xpose.msra.mxu0 0.0
        %837 = vmatprep.subr.mxu0 0.0
        %838 = vmatpush1.xpose.msra.mxu0 0.0
        %839 = vmatprep.subr.mxu0 0.0
        %840 = vmatpush1.xpose.msra.mxu0 0.0
        %841 = vmatprep.subr.mxu0 0.0
        %842 = vmatpush1.xpose.msra.mxu0 0.0
        %843 = vmatprep.subr.mxu0 0.0
        %844 = vmatpush1.xpose.msra.mxu0 0.0
        %845 = vmatprep.subr.mxu0 0.0
        %846 = vmatpush1.xpose.msra.mxu0 0.0
        %847 = vmatprep.subr.mxu0 0.0
        %848 = vmatpush1.xpose.msra.mxu0 0.0
        %849 = vmatprep.subr.mxu0 0.0
        %850 = vmatpush1.xpose.msra.mxu0 0.0
        %851 = vmatprep.subr.mxu0 0.0
        %852 = vmatpush1.xpose.msra.mxu0 0.0
        %853 = vmatprep.subr.mxu0 0.0
        %854 = vmatpush1.xpose.msra.mxu0 0.0
        %855 = vmatprep.subr.mxu0 0.0
        %856 = vmatpush1.xpose.msra.mxu0 0.0
        %857 = vmatprep.subr.mxu0 0.0
        %858 = vmatpush1.xpose.msra.mxu0 0.0
        %859 = vmatprep.subr.mxu0 0.0
        %860 = vmatpush1.xpose.msra.mxu0 0.0
        %861 = vmatprep.subr.mxu0 0.0
        %862 = vmatpush1.xpose.msra.mxu0 0.0
        %863 = vmatprep.subr.mxu0 0.0
        %864 = vmatpush1.xpose.msra.mxu0 0.0
        %865 = vmatprep.subr.mxu0 0.0
        %866 = vmatpush1.xpose.msra.mxu0 0.0
        %867 = vmatprep.subr.mxu0 0.0
        %868 = vmatpush1.xpose.msra.mxu0 0.0
        %869 = vmatprep.subr.mxu0 0.0
        %870 = vmatpush1.xpose.msra.mxu0 0.0
        %871 = vmatprep.subr.mxu0 0.0
        %872 = vmatpush1.xpose.msra.mxu0 0.0
        %873 = vmatprep.subr.mxu0 0.0
        %874 = vmatpush1.xpose.msra.mxu0 0.0
        %875 = vmatprep.subr.mxu0 0.0
        %876 = vmatpush1.xpose.msra.mxu0 0.0
        %877 = vmatprep.subr.mxu0 0.0
        %878 = vmatpush1.xpose.msra.mxu0 0.0
        %879 = vmatprep.subr.mxu0 0.0
        %880 = vmatpush1.xpose.msra.mxu0 0.0
        %881 = vmatprep.subr.mxu0 0.0
        %882 = vmatpush1.xpose.msra.mxu0 0.0
        %883 = vmatprep.subr.mxu0 0.0
        %884 = vmatpush1.xpose.msra.mxu0 0.0
        %885 = vmatprep.subr.mxu0 0.0
        %886 = vmatpush1.xpose.msra.mxu0 0.0
        %887 = vmatprep.subr.mxu0 0.0
        %888 = vmatpush1.xpose.msra.mxu0 0.0
        %889 = vmatprep.subr.mxu0 0.0
        %890 = vmatpush1.xpose.msra.mxu0 0.0
        %891 = vmatprep.subr.mxu0 0.0
        %892 = vmatpush1.xpose.msra.mxu0 0.0
        %893 = vmatprep.mubr.f32.mxu0 0.0
        %894 = vmatmul.mubr.f32.gmra.mrb[0].mxu0 %v825
        %v895 = vpop.f32.mrb[0].mxu0
        %v896 = vadd.f32 0.0, %v895
        %v897 = vpop.f32.mrb[0].mxu0
        %898 = vdwg.mxu0
        %vm899 = vcmask 64512
        %v900 = vsel %vm899, %v819, -inf
        %901 = vmax.xlane.f32.xlu0 %v900
        %v902 = vpop.xlane.xlu0 %901
        %v903 = vsel %vm899, %v896, -inf
        %904 = vmax.xlane.f32.xlu0 %v903
        %v905 = vpop.xlane.xlu0 %904
        %v906 = vsub.f32 %v819, %v902
        %v907 = vsub.f32 %v896, %v905
        %v908 = vmul.f32 %v906, 1.442695
        %v909 = vpow.pop %v908
        %v910 = vmul.f32 %v907, 1.442695
        %v911 = vpow.pop %v910
        %v912 = vsel %vm899, %v909, 0.0
        %913 = vadd.xlane.f32.xlu0 %v912
        %v914 = vpop.xlane.xlu0 %913
        %v915 = vsel %vm899, %v911, 0.0
        %916 = vadd.xlane.f32.xlu0 %v915
        %v917 = vpop.xlane.xlu0 %916
        %v918 = vrcp.pop %v914
        %v919 = vrcp.pop %v917
        %v920 = vmul.f32 %v909, %v918
        %v921 = vmul.f32 %v911, %v919
        %922 = vrot.lane.b32.xlu0 %v737, 64
        %v923 = vpop.permute.xlu0 %922
        %v926 = vsel %vm899, %v920, 0
        %928 = vmatprep.subr.mxu0 0.0
        %929 = vmatpush1.msra.mxu0 %v923
        %930 = vmatprep.subr.mxu0 0.0
        %931 = vmatpush1.msra.mxu0 0.0
        %932 = vmatprep.subr.mxu0 0.0
        %933 = vmatpush1.msra.mxu0 0.0
        %934 = vmatprep.subr.mxu0 0.0
        %935 = vmatpush1.msra.mxu0 0.0
        %936 = vmatprep.subr.mxu0 0.0
        %937 = vmatpush1.msra.mxu0 0.0
        %938 = vmatprep.subr.mxu0 0.0
        %939 = vmatpush1.msra.mxu0 0.0
        %940 = vmatprep.subr.mxu0 0.0
        %941 = vmatpush1.msra.mxu0 0.0
        %942 = vmatprep.subr.mxu0 0.0
        %943 = vmatpush1.msra.mxu0 0.0
        %944 = vmatprep.subr.mxu0 0.0
        %945 = vmatpush1.msra.mxu0 0.0
        %946 = vmatprep.subr.mxu0 0.0
        %947 = vmatpush1.msra.mxu0 0.0
        %948 = vmatprep.subr.mxu0 0.0
        %949 = vmatpush1.msra.mxu0 0.0
        %950 = vmatprep.subr.mxu0 0.0
        %951 = vmatpush1.msra.mxu0 0.0
        %952 = vmatprep.subr.mxu0 0.0
        %953 = vmatpush1.msra.mxu0 0.0
        %954 = vmatprep.subr.mxu0 0.0
        %955 = vmatpush1.msra.mxu0 0.0
        %956 = vmatprep.subr.mxu0 0.0
        %957 = vmatpush1.msra.mxu0 0.0
        %958 = vmatprep.subr.mxu0 0.0
        %959 = vmatpush1.msra.mxu0 0.0
        %960 = vmatprep.subr.mxu0 0.0
        %961 = vmatpush1.msra.mxu0 0.0
        %962 = vmatprep.subr.mxu0 0.0
        %963 = vmatpush1.msra.mxu0 0.0
        %964 = vmatprep.subr.mxu0 0.0
        %965 = vmatpush1.msra.mxu0 0.0
        %966 = vmatprep.subr.mxu0 0.0
        %967 = vmatpush1.msra.mxu0 0.0
        %968 = vmatprep.subr.mxu0 0.0
        %969 = vmatpush1.msra.mxu0 0.0
        %970 = vmatprep.subr.mxu0 0.0
        %971 = vmatpush1.msra.mxu0 0.0
        %972 = vmatprep.subr.mxu0 0.0
        %973 = vmatpush1.msra.mxu0 0.0
        %974 = vmatprep.subr.mxu0 0.0
        %975 = vmatpush1.msra.mxu0 0.0
        %976 = vmatprep.subr.mxu0 0.0
        %977 = vmatpush1.msra.mxu0 0.0
        %978 = vmatprep.subr.mxu0 0.0
        %979 = vmatpush1.msra.mxu0 0.0
        %980 = vmatprep.subr.mxu0 0.0
        %981 = vmatpush1.msra.mxu0 0.0
        %982 = vmatprep.subr.mxu0 0.0
        %983 = vmatpush1.msra.mxu0 0.0
        %984 = vmatprep.subr.mxu0 0.0
        %985 = vmatpush1.msra.mxu0 0.0
        %986 = vmatprep.subr.mxu0 0.0
        %987 = vmatpush1.msra.mxu0 0.0
        %988 = vmatprep.subr.mxu0 0.0
        %989 = vmatpush1.msra.mxu0 0.0
        %990 = vmatprep.subr.mxu0 0.0
        %991 = vmatpush1.msra.mxu0 0.0
        %992 = vmatprep.mubr.f32.mxu0 0.0
        %993 = vmatmul.mubr.f32.gmra.mrb[0].mxu0 %v926
        %v994 = vpop.f32.mrb[0].mxu0
        %v995 = vadd.f32 0.0, %v994
        %v996 = vpop.f32.mrb[0].mxu0
        %997 = vdwg.mxu0
        %998 = vrot.lane.b32.xlu0 %v742, 64
        %v999 = vpop.permute.xlu0 %998
        %v1002 = vsel %vm899, %v921, 0
        %1004 = vmatprep.subr.mxu0 0.0
        %1005 = vmatpush1.msra.mxu0 %v999
        %1006 = vmatprep.subr.mxu0 0.0
        %1007 = vmatpush1.msra.mxu0 0.0
        %1008 = vmatprep.subr.mxu0 0.0
        %1009 = vmatpush1.msra.mxu0 0.0
        %1010 = vmatprep.subr.mxu0 0.0
        %1011 = vmatpush1.msra.mxu0 0.0
        %1012 = vmatprep.subr.mxu0 0.0
        %1013 = vmatpush1.msra.mxu0 0.0
        %1014 = vmatprep.subr.mxu0 0.0
        %1015 = vmatpush1.msra.mxu0 0.0
        %1016 = vmatprep.subr.mxu0 0.0
        %1017 = vmatpush1.msra.mxu0 0.0
        %1018 = vmatprep.subr.mxu0 0.0
        %1019 = vmatpush1.msra.mxu0 0.0
        %1020 = vmatprep.subr.mxu0 0.0
        %1021 = vmatpush1.msra.mxu0 0.0
        %1022 = vmatprep.subr.mxu0 0.0
        %1023 = vmatpush1.msra.mxu0 0.0
        %1024 = vmatprep.subr.mxu0 0.0
        %1025 = vmatpush1.msra.mxu0 0.0
        %1026 = vmatprep.subr.mxu0 0.0
        %1027 = vmatpush1.msra.mxu0 0.0
        %1028 = vmatprep.subr.mxu0 0.0
        %1029 = vmatpush1.msra.mxu0 0.0
        %1030 = vmatprep.subr.mxu0 0.0
        %1031 = vmatpush1.msra.mxu0 0.0
        %1032 = vmatprep.subr.mxu0 0.0
        %1033 = vmatpush1.msra.mxu0 0.0
        %1034 = vmatprep.subr.mxu0 0.0
        %1035 = vmatpush1.msra.mxu0 0.0
        %1036 = vmatprep.subr.mxu0 0.0
        %1037 = vmatpush1.msra.mxu0 0.0
        %1038 = vmatprep.subr.mxu0 0.0
        %1039 = vmatpush1.msra.mxu0 0.0
        %1040 = vmatprep.subr.mxu0 0.0
        %1041 = vmatpush1.msra.mxu0 0.0
        %1042 = vmatprep.subr.mxu0 0.0
        %1043 = vmatpush1.msra.mxu0 0.0
        %1044 = vmatprep.subr.mxu0 0.0
        %1045 = vmatpush1.msra.mxu0 0.0
        %1046 = vmatprep.subr.mxu0 0.0
        %1047 = vmatpush1.msra.mxu0 0.0
        %1048 = vmatprep.subr.mxu0 0.0
        %1049 = vmatpush1.msra.mxu0 0.0
        %1050 = vmatprep.subr.mxu0 0.0
        %1051 = vmatpush1.msra.mxu0 0.0
        %1052 = vmatprep.subr.mxu0 0.0
        %1053 = vmatpush1.msra.mxu0 0.0
        %1054 = vmatprep.subr.mxu0 0.0
        %1055 = vmatpush1.msra.mxu0 0.0
        %1056 = vmatprep.subr.mxu0 0.0
        %1057 = vmatpush1.msra.mxu0 0.0
        %1058 = vmatprep.subr.mxu0 0.0
        %1059 = vmatpush1.msra.mxu0 0.0
        %1060 = vmatprep.subr.mxu0 0.0
        %1061 = vmatpush1.msra.mxu0 0.0
        %1062 = vmatprep.subr.mxu0 0.0
        %1063 = vmatpush1.msra.mxu0 0.0
        %1064 = vmatprep.subr.mxu0 0.0
        %1065 = vmatpush1.msra.mxu0 0.0
        %1066 = vmatprep.subr.mxu0 0.0
        %1067 = vmatpush1.msra.mxu0 0.0
        %1068 = vmatprep.mubr.f32.mxu0 0.0
        %1069 = vmatmul.mubr.f32.gmra.mrb[0].mxu0 %v1002
        %v1070 = vpop.f32.mrb[0].mxu0
        %v1071 = vadd.f32 0.0, %v1070
        %v1072 = vpop.f32.mrb[0].mxu0
        %1073 = vdwg.mxu0
        %v1074 = vld [vmem:[%s608] sm:$0xff]
        %v1075 = vld [vmem:[%s608 + $0x8] sm:$0xff]
        %v1076 = vld [vmem:[%s608 + $0x10] sm:$0xff]
        %v1077 = vld [vmem:[%s608 + $0x18] sm:$0xff]
        %v1078 = vld [vmem:[%s611] sm:$0x1]
        %v1080 = vlaneseq
        %v1081 = vshrl.u32 %v1080, 7
        %v1082 = vsub.s32 0, %v1081
        %v1083 = vrot.slane %v1078, %v1082
        %v1086 = vsel %vm663, %v995, 0
        %v1089 = vsel %vm663, %v1071, 0
        %1091 = vmatprep.subr.mxu0 0.0
        %1092 = vmatpush1.msra.mxu0 %v1074
        %1093 = vmatprep.subr.mxu0 0.0
        %1094 = vmatpush1.msra.mxu0 %v1075
        %1095 = vmatprep.subr.mxu0 0.0
        %1096 = vmatpush1.msra.mxu0 %v1076
        %1097 = vmatprep.subr.mxu0 0.0
        %1098 = vmatpush1.msra.mxu0 %v1077
        %1099 = vmatprep.subr.mxu0 0.0
        %1100 = vmatpush1.msra.mxu0 0.0
        %1101 = vmatprep.subr.mxu0 0.0
        %1102 = vmatpush1.msra.mxu0 0.0
        %1103 = vmatprep.subr.mxu0 0.0
        %1104 = vmatpush1.msra.mxu0 0.0
        %1105 = vmatprep.subr.mxu0 0.0
        %1106 = vmatpush1.msra.mxu0 0.0
        %1107 = vmatprep.subr.mxu0 0.0
        %1108 = vmatpush1.msra.mxu0 0.0
        %1109 = vmatprep.subr.mxu0 0.0
        %1110 = vmatpush1.msra.mxu0 0.0
        %1111 = vmatprep.subr.mxu0 0.0
        %1112 = vmatpush1.msra.mxu0 0.0
        %1113 = vmatprep.subr.mxu0 0.0
        %1114 = vmatpush1.msra.mxu0 0.0
        %1115 = vmatprep.subr.mxu0 0.0
        %1116 = vmatpush1.msra.mxu0 0.0
        %1117 = vmatprep.subr.mxu0 0.0
        %1118 = vmatpush1.msra.mxu0 0.0
        %1119 = vmatprep.subr.mxu0 0.0
        %1120 = vmatpush1.msra.mxu0 0.0
        %1121 = vmatprep.subr.mxu0 0.0
        %1122 = vmatpush1.msra.mxu0 0.0
        %1123 = vmatprep.subr.mxu0 0.0
        %1124 = vmatpush1.msra.mxu0 0.0
        %1125 = vmatprep.subr.mxu0 0.0
        %1126 = vmatpush1.msra.mxu0 0.0
        %1127 = vmatprep.subr.mxu0 0.0
        %1128 = vmatpush1.msra.mxu0 0.0
        %1129 = vmatprep.subr.mxu0 0.0
        %1130 = vmatpush1.msra.mxu0 0.0
        %1131 = vmatprep.subr.mxu0 0.0
        %1132 = vmatpush1.msra.mxu0 0.0
        %1133 = vmatprep.subr.mxu0 0.0
        %1134 = vmatpush1.msra.mxu0 0.0
        %1135 = vmatprep.subr.mxu0 0.0
        %1136 = vmatpush1.msra.mxu0 0.0
        %1137 = vmatprep.subr.mxu0 0.0
        %1138 = vmatpush1.msra.mxu0 0.0
        %1139 = vmatprep.subr.mxu0 0.0
        %1140 = vmatpush1.msra.mxu0 0.0
        %1141 = vmatprep.subr.mxu0 0.0
        %1142 = vmatpush1.msra.mxu0 0.0
        %1143 = vmatprep.subr.mxu0 0.0
        %1144 = vmatpush1.msra.mxu0 0.0
        %1145 = vmatprep.subr.mxu0 0.0
        %1146 = vmatpush1.msra.mxu0 0.0
        %1147 = vmatprep.subr.mxu0 0.0
        %1148 = vmatpush1.msra.mxu0 0.0
        %1149 = vmatprep.subr.mxu0 0.0
        %1150 = vmatpush1.msra.mxu0 0.0
        %1151 = vmatprep.subr.mxu0 0.0
        %1152 = vmatpush1.msra.mxu0 0.0
        %1153 = vmatprep.subr.mxu0 0.0
        %1154 = vmatpush1.msra.mxu0 0.0
        %1155 = vmatprep.mubr.f32.mxu0 0.0
        %1156 = vmatmul.mubr.f32.gmra.mrb[0].mxu0 %v1086
        %v1157 = vpop.f32.mrb[0].mxu0
        %v1158 = vadd.f32 %v1083, %v1157
        %v1159 = vpop.f32.mrb[0].mxu0
        %1160 = vmatprep.mubr.f32.mxu0 0.0
        %1161 = vmatmul.mubr.f32.gmra.mrb[0].mxu0 %v1089
        %v1162 = vpop.f32.mrb[0].mxu0
        %v1163 = vadd.f32 %v1083, %v1162
        %v1164 = vpop.f32.mrb[0].mxu0
        %1165 = vdwg.mxu0
        %v1166 = vadd.f32 %v650, %v1158
        %v1167 = vadd.f32 %v651, %v1163
        %v1168 = vld [vmem:[%s614] sm:$0x1]
        %v1169 = vld [vmem:[%s617] sm:$0x1]
        %v1170 = vsel %vm663, %v1166, 0.0
        %1171 = vadd.xlane.f32.xlu0 %v1170
        %v1172 = vpop.xlane.xlu0 %1171
        %v1173 = vsel %vm663, %v1167, 0.0
        %1174 = vadd.xlane.f32.xlu0 %v1173
        %v1175 = vpop.xlane.xlu0 %1174
        %v1176 = vmul.f32 %v1166, %v1166
        %v1177 = vmul.f32 %v1167, %v1167
        %v1178 = vsel %vm663, %v1176, 0.0
        %1179 = vadd.xlane.f32.xlu0 %v1178
        %v1180 = vpop.xlane.xlu0 %1179
        %v1181 = vsel %vm663, %v1177, 0.0
        %1182 = vadd.xlane.f32.xlu0 %v1181
        %v1183 = vpop.xlane.xlu0 %1182
        %v1184 = vmul.f32 %v1172, 0.03125
        %v1185 = vmul.f32 %v1175, 0.03125
        %v1186 = vmul.f32 %v1180, 0.03125
        %v1187 = vmul.f32 %v1183, 0.03125
        %v1188 = vmul.f32 %v1184, %v1184
        %v1189 = vmul.f32 %v1185, %v1185
        %v1190 = vsub.f32 %v1186, %v1188
        %v1191 = vsub.f32 %v1187, %v1189
        %v1192 = vmax.f32 %v1190, 0.0
        %v1193 = vmax.f32 %v1191, 0.0
        %v1194 = vsub.f32 %v1166, %v1184
        %v1195 = vsub.f32 %v1167, %v1185
        %v1196 = vadd.f32 %v1192, 1e-05
        %v1197 = vadd.f32 %v1193, 1e-05
        %v1198 = vrsqrt.pop %v1196
        %v1199 = vrsqrt.pop %v1197
        %v1200 = vmul.f32 %v1194, %v1198
        %v1201 = vmul.f32 %v1195, %v1199
        %v1203 = vlaneseq
        %v1204 = vshrl.u32 %v1203, 7
        %v1205 = vsub.s32 0, %v1204
        %v1206 = vrot.slane %v1168, %v1205
        %v1208 = vmul.f32 %v1200, %v1206
        %v1209 = vmul.f32 %v1201, %v1206
        %v1211 = vlaneseq
        %v1212 = vshrl.u32 %v1211, 7
        %v1213 = vsub.s32 0, %v1212
        %v1214 = vrot.slane %v1169, %v1213
        %v1216 = vadd.f32 %v1208, %v1214
        %v1217 = vadd.f32 %v1209, %v1214
        %v1218 = vld [vmem:[%s622] sm:$0xff]
        %v1219 = vld [vmem:[%s622 + $0x8] sm:$0xff]
        %v1220 = vld [vmem:[%s622 + $0x10] sm:$0xff]
        %v1221 = vld [vmem:[%s622 + $0x18] sm:$0xff]
        %v1222 = vld [vmem:[%s625] sm:$0x1]
        %v1224 = vlaneseq
        %v1225 = vshrl.u32 %v1224, 7
        %v1226 = vsub.s32 0, %v1225
        %v1227 = vrot.slane %v1222, %v1226
        %v1230 = vsel %vm663, %v1216, 0
        %v1233 = vsel %vm663, %v1217, 0
        %1235 = vmatprep.subr.mxu0 0.0
        %1236 = vmatpush1.msra.mxu0 %v1218
        %1237 = vmatprep.subr.mxu0 0.0
        %1238 = vmatpush1.msra.mxu0 %v1219
        %1239 = vmatprep.subr.mxu0 0.0
        %1240 = vmatpush1.msra.mxu0 %v1220
        %1241 = vmatprep.subr.mxu0 0.0
        %1242 = vmatpush1.msra.mxu0 %v1221
        %1243 = vmatprep.subr.mxu0 0.0
        %1244 = vmatpush1.msra.mxu0 0.0
        %1245 = vmatprep.subr.mxu0 0.0
        %1246 = vmatpush1.msra.mxu0 0.0
        %1247 = vmatprep.subr.mxu0 0.0
        %1248 = vmatpush1.msra.mxu0 0.0
        %1249 = vmatprep.subr.mxu0 0.0
        %1250 = vmatpush1.msra.mxu0 0.0
        %1251 = vmatprep.subr.mxu0 0.0
        %1252 = vmatpush1.msra.mxu0 0.0
        %1253 = vmatprep.subr.mxu0 0.0
        %1254 = vmatpush1.msra.mxu0 0.0
        %1255 = vmatprep.subr.mxu0 0.0
        %1256 = vmatpush1.msra.mxu0 0.0
        %1257 = vmatprep.subr.mxu0 0.0
        %1258 = vmatpush1.msra.mxu0 0.0
        %1259 = vmatprep.subr.mxu0 0.0
        %1260 = vmatpush1.msra.mxu0 0.0
        %1261 = vmatprep.subr.mxu0 0.0
        %1262 = vmatpush1.msra.mxu0 0.0
        %1263 = vmatprep.subr.mxu0 0.0
        %1264 = vmatpush1.msra.mxu0 0.0
        %1265 = vmatprep.subr.mxu0 0.0
        %1266 = vmatpush1.msra.mxu0 0.0
        %1267 = vmatprep.subr.mxu0 0.0
        %1268 = vmatpush1.msra.mxu0 0.0
        %1269 = vmatprep.subr.mxu0 0.0
        %1270 = vmatpush1.msra.mxu0 0.0
        %1271 = vmatprep.subr.mxu0 0.0
        %1272 = vmatpush1.msra.mxu0 0.0
        %1273 = vmatprep.subr.mxu0 0.0
        %1274 = vmatpush1.msra.mxu0 0.0
        %1275 = vmatprep.subr.mxu0 0.0
        %1276 = vmatpush1.msra.mxu0 0.0
        %1277 = vmatprep.subr.mxu0 0.0
        %1278 = vmatpush1.msra.mxu0 0.0
        %1279 = vmatprep.subr.mxu0 0.0
        %1280 = vmatpush1.msra.mxu0 0.0
        %1281 = vmatprep.subr.mxu0 0.0
        %1282 = vmatpush1.msra.mxu0 0.0
        %1283 = vmatprep.subr.mxu0 0.0
        %1284 = vmatpush1.msra.mxu0 0.0
        %1285 = vmatprep.subr.mxu0 0.0
        %1286 = vmatpush1.msra.mxu0 0.0
        %1287 = vmatprep.subr.mxu0 0.0
        %1288 = vmatpush1.msra.mxu0 0.0
        %1289 = vmatprep.subr.mxu0 0.0
        %1290 = vmatpush1.msra.mxu0 0.0
        %1291 = vmatprep.subr.mxu0 0.0
        %1292 = vmatpush1.msra.mxu0 0.0
        %1293 = vmatprep.subr.mxu0 0.0
        %1294 = vmatpush1.msra.mxu0 0.0
        %1295 = vmatprep.subr.mxu0 0.0
        %1296 = vmatpush1.msra.mxu0 0.0
        %1297 = vmatprep.subr.mxu0 0.0
        %1298 = vmatpush1.msra.mxu0 0.0
        %1299 = vmatprep.mubr.f32.mxu0 0.0
        %1300 = vmatmul.mubr.f32.gmra.mrb[0].mxu0 %v1230
        %v1301 = vpop.f32.mrb[0].mxu0
        %v1302 = vadd.f32 %v1227, %v1301
        %v1303 = vpop.f32.mrb[0].mxu0
        %1304 = vmatprep.mubr.f32.mxu0 0.0
        %1305 = vmatmul.mubr.f32.gmra.mrb[0].mxu0 %v1233
        %v1306 = vpop.f32.mrb[0].mxu0
        %v1307 = vadd.f32 %v1227, %v1306
        %v1308 = vpop.f32.mrb[0].mxu0
        %1309 = vdwg.mxu0
        %v1310 = vmax.f32 %v1302, 0.0
        %v1311 = vmax.f32 %v1307, 0.0
        %v1312 = vld [vmem:[%s630] sm:$0xff]
        %v1313 = vld [vmem:[%s630 + $0x8] sm:$0xff]
        %v1314 = vld [vmem:[%s630 + $0x10] sm:$0xff]
        %v1315 = vld [vmem:[%s630 + $0x18] sm:$0xff]
        %v1316 = vld [vmem:[%s630 + $0x20] sm:$0xff]
        %v1317 = vld [vmem:[%s630 + $0x28] sm:$0xff]
        %v1318 = vld [vmem:[%s630 + $0x30] sm:$0xff]
        %v1319 = vld [vmem:[%s630 + $0x38] sm:$0xff]
        %v1320 = vld [vmem:[%s633] sm:$0x1]
        %v1322 = vlaneseq
        %v1323 = vshrl.u32 %v1322, 7
        %v1324 = vsub.s32 0, %v1323
        %v1325 = vrot.slane %v1320, %v1324
        %vm1327 = vcmask 523264
        %v1329 = vsel %vm1327, %v1310, 0
        %v1332 = vsel %vm1327, %v1311, 0
        %1334 = vmatprep.subr.mxu0 0.0
        %1335 = vmatpush1.msra.mxu0 %v1312
        %1336 = vmatprep.subr.mxu0 0.0
        %1337 = vmatpush1.msra.mxu0 %v1313
        %1338 = vmatprep.subr.mxu0 0.0
        %1339 = vmatpush1.msra.mxu0 %v1314
        %1340 = vmatprep.subr.mxu0 0.0
        %1341 = vmatpush1.msra.mxu0 %v1315
        %1342 = vmatprep.subr.mxu0 0.0
        %1343 = vmatpush1.msra.mxu0 %v1316
        %1344 = vmatprep.subr.mxu0 0.0
        %1345 = vmatpush1.msra.mxu0 %v1317
        %1346 = vmatprep.subr.mxu0 0.0
        %1347 = vmatpush1.msra.mxu0 %v1318
        %1348 = vmatprep.subr.mxu0 0.0
        %1349 = vmatpush1.msra.mxu0 %v1319
        %1350 = vmatprep.subr.mxu0 0.0
        %1351 = vmatpush1.msra.mxu0 0.0
        %1352 = vmatprep.subr.mxu0 0.0
        %1353 = vmatpush1.msra.mxu0 0.0
        %1354 = vmatprep.subr.mxu0 0.0
        %1355 = vmatpush1.msra.mxu0 0.0
        %1356 = vmatprep.subr.mxu0 0.0
        %1357 = vmatpush1.msra.mxu0 0.0
        %1358 = vmatprep.subr.mxu0 0.0
        %1359 = vmatpush1.msra.mxu0 0.0
        %1360 = vmatprep.subr.mxu0 0.0
        %1361 = vmatpush1.msra.mxu0 0.0
        %1362 = vmatprep.subr.mxu0 0.0
        %1363 = vmatpush1.msra.mxu0 0.0
        %1364 = vmatprep.subr.mxu0 0.0
        %1365 = vmatpush1.msra.mxu0 0.0
        %1366 = vmatprep.subr.mxu0 0.0
        %1367 = vmatpush1.msra.mxu0 0.0
        %1368 = vmatprep.subr.mxu0 0.0
        %1369 = vmatpush1.msra.mxu0 0.0
        %1370 = vmatprep.subr.mxu0 0.0
        %1371 = vmatpush1.msra.mxu0 0.0
        %1372 = vmatprep.subr.mxu0 0.0
        %1373 = vmatpush1.msra.mxu0 0.0
        %1374 = vmatprep.subr.mxu0 0.0
        %1375 = vmatpush1.msra.mxu0 0.0
        %1376 = vmatprep.subr.mxu0 0.0
        %1377 = vmatpush1.msra.mxu0 0.0
        %1378 = vmatprep.subr.mxu0 0.0
        %1379 = vmatpush1.msra.mxu0 0.0
        %1380 = vmatprep.subr.mxu0 0.0
        %1381 = vmatpush1.msra.mxu0 0.0
        %1382 = vmatprep.subr.mxu0 0.0
        %1383 = vmatpush1.msra.mxu0 0.0
        %1384 = vmatprep.subr.mxu0 0.0
        %1385 = vmatpush1.msra.mxu0 0.0
        %1386 = vmatprep.subr.mxu0 0.0
        %1387 = vmatpush1.msra.mxu0 0.0
        %1388 = vmatprep.subr.mxu0 0.0
        %1389 = vmatpush1.msra.mxu0 0.0
        %1390 = vmatprep.subr.mxu0 0.0
        %1391 = vmatpush1.msra.mxu0 0.0
        %1392 = vmatprep.subr.mxu0 0.0
        %1393 = vmatpush1.msra.mxu0 0.0
        %1394 = vmatprep.subr.mxu0 0.0
        %1395 = vmatpush1.msra.mxu0 0.0
        %1396 = vmatprep.subr.mxu0 0.0
        %1397 = vmatpush1.msra.mxu0 0.0
        %1398 = vmatprep.mubr.f32.mxu0 0.0
        %1399 = vmatmul.mubr.f32.gmra.mrb[0].mxu0 %v1329
        %v1400 = vpop.f32.mrb[0].mxu0
        %v1401 = vadd.f32 %v1325, %v1400
        %v1402 = vpop.f32.mrb[0].mxu0
        %1403 = vmatprep.mubr.f32.mxu0 0.0
        %1404 = vmatmul.mubr.f32.gmra.mrb[0].mxu0 %v1332
        %v1405 = vpop.f32.mrb[0].mxu0
        %v1406 = vadd.f32 %v1325, %v1405
        %v1407 = vpop.f32.mrb[0].mxu0
        %1408 = vdwg.mxu0
        %v1409 = vadd.f32 %v1216, %v1401
        %v1410 = vadd.f32 %v1217, %v1406
        %v1411 = vld [vmem:[%s636] sm:$0x1]
        %v1412 = vld [vmem:[%s639] sm:$0x1]
        %v1413 = vsel %vm663, %v1409, 0.0
        %1414 = vadd.xlane.f32.xlu0 %v1413
        %v1415 = vpop.xlane.xlu0 %1414
        %v1416 = vsel %vm663, %v1410, 0.0
        %1417 = vadd.xlane.f32.xlu0 %v1416
        %v1418 = vpop.xlane.xlu0 %1417
        %v1419 = vmul.f32 %v1409, %v1409
        %v1420 = vmul.f32 %v1410, %v1410
        %v1421 = vsel %vm663, %v1419, 0.0
        %1422 = vadd.xlane.f32.xlu0 %v1421
        %v1423 = vpop.xlane.xlu0 %1422
        %v1424 = vsel %vm663, %v1420, 0.0
        %1425 = vadd.xlane.f32.xlu0 %v1424
        %v1426 = vpop.xlane.xlu0 %1425
        %v1427 = vmul.f32 %v1415, 0.03125
        %v1428 = vmul.f32 %v1418, 0.03125
        %v1429 = vmul.f32 %v1423, 0.03125
        %v1430 = vmul.f32 %v1426, 0.03125
        %v1431 = vmul.f32 %v1427, %v1427
        %v1432 = vmul.f32 %v1428, %v1428
        %v1433 = vsub.f32 %v1429, %v1431
        %v1434 = vsub.f32 %v1430, %v1432
        %v1435 = vmax.f32 %v1433, 0.0
        %v1436 = vmax.f32 %v1434, 0.0
        %v1437 = vsub.f32 %v1409, %v1427
        %v1438 = vsub.f32 %v1410, %v1428
        %v1439 = vadd.f32 %v1435, 1e-05
        %v1440 = vadd.f32 %v1436, 1e-05
        %v1441 = vrsqrt.pop %v1439
        %v1442 = vrsqrt.pop %v1440
        %v1443 = vmul.f32 %v1437, %v1441
        %v1444 = vmul.f32 %v1438, %v1442
        %v1446 = vlaneseq
        %v1447 = vshrl.u32 %v1446, 7
        %v1448 = vsub.s32 0, %v1447
        %v1449 = vrot.slane %v1411, %v1448
        %v1451 = vmul.f32 %v1443, %v1449
        %v1452 = vmul.f32 %v1444, %v1449
        %v1454 = vlaneseq
        %v1455 = vshrl.u32 %v1454, 7
        %v1456 = vsub.s32 0, %v1455
        %v1457 = vrot.slane %v1412, %v1456
        %v1459 = vadd.f32 %v1451, %v1457
        %v1460 = vadd.f32 %v1452, %v1457
        %1461 = vst.msk [vmem:[#allocation5] sm:$0xff] %vm663, %v1459
        %1462 = vst.msk [vmem:[#allocation5 + $0x8] sm:$0xff] %vm663, %v1460
        // Predicated region
        $region81: #{tpu_custom_call.1} parent=71 // pred_check
          %p1463 = pneg %p394
        $region82: #{tpu_custom_call.1} parent=71 // pred_check_branch
          %1465 = sbr.rel (%p1463) target = $region84
        $region83: #{tpu_custom_call.1} parent=71 // pred_region
          %s1466 = smul.u32 2, %s30
          %s1468 = ssub.s32 256, 256
          %1469 = vsyncadd [#allocation4], %s1468
          %s1470 = smul.addr %s1466, 128
          %s1471 = scalar_lea.hbm %s13, %s1470
          %s1472 = sshll.u32 [#allocation5], 4
          %s1473 = int_to_ptr.vmem [resolvable:$true] %s1472
          %1478 = dma.vmem_to_hbm [thread:$0]  %s1473, 256, %s1471, [#allocation4], 128, 128, 8
        $region84: #{tpu_custom_call.1} parent=71 // pred_fallthru
          _
        // Predicated region
        $region85: #{tpu_custom_call.1} parent=71 // pred_check
          %p1479 = pneg %p394
        $region86: #{tpu_custom_call.1} parent=71 // pred_check_branch
          %1481 = sbr.rel (%p1479) target = $region88
        $region87: #{tpu_custom_call.1} parent=71 // pred_region
          %1482 = dma.done [#allocation4], 256
        $region88: #{tpu_custom_call.1} parent=71 // pred_fallthru
          _
      $region72: #{tpu_custom_call.1} parent=5 // pred_fallthru
        _
      %p1483 = scmp.le.s32.totalorder 2, %s21
      // Predicated region
      $region89: #{tpu_custom_call.1} parent=5 // pred_check
        %p1484 = pneg %p1483
      $region90: #{tpu_custom_call.1} parent=5 // pred_check_branch
        %1486 = sbr.rel (%p1484) target = $region92
      $region91: #{tpu_custom_call.1} parent=5 // pred_region
        %s1487 = ssub.s32 %s21, 2
      $region92: #{tpu_custom_call.1} parent=5 // pred_fallthru
        _
    $region6: #{tpu_custom_call.1} parent=1 // loop_footer
      %s25 = sadd.s32 1, %s21
    $region7: #{tpu_custom_call.1} parent=1 // loop_footer_branch
      %20 = sbr.rel target = $region3
    $region8: #{tpu_custom_call.1} parent=1 // loop_exit
      _
    %1488 = vsyncpa [#allocation3], 1
    %s1489 = scalar_lea.sflag [#allocation3], 1
    %1490 = vsyncpa %s1489, 1
    %1491 = vsyncpa [#allocation4], 1
    %s1492 = scalar_lea.sflag [#allocation4], 1
    %1493 = vsyncpa %s1492, 1

</llo_original>
